<compile_context>
chip_gen: v5e
topology: v5e:2x2
jax: 0.10.0
libtpu: 0.0.40
codegen_flags: <defaults>
</compile_context>

<pallas_src>
import functools

import jax
import jax.numpy as jnp
from jax.experimental import pallas as pl
from jax.experimental.pallas import tpu as pltpu


# --------------------------------------------------------------------------
# VMEM budgeting (per TPU generation).
# --------------------------------------------------------------------------
def _vmem_limits():
    """Returns (scoped_vmem_limit_bytes, live_bytes_budget_for_tiling)."""
    cap = None
    try:
        info = pltpu.get_tpu_info()
        cap = int(getattr(info, "vmem_capacity_bytes", 0)) or None
    except Exception:
        cap = None
    if cap is None:
        cap = 64 * 1024 * 1024                       # be v7x-safe when unknown
    limit = min((cap * 3) // 4, 96 * 1024 * 1024)    # ~48 MiB v7x, 96 MiB v5e/v6e
    return limit, limit // 2


def _choose_tile(extent, granule, live_bytes_per_unit, budget_bytes, min_steps):
    """Largest divisor-of-extent tile (multiple of `granule`, or full extent)
    that fits the live-bytes budget, preferring tiles that leave at least
    `min_steps` grid steps along this axis (megacore / v7x feeding)."""
    cands = sorted({d for d in range(granule, extent, granule) if extent % d == 0}
                   | {extent})
    fitting = [c for c in cands if c * live_bytes_per_unit <= budget_bytes]
    if not fitting:
        fitting = [cands[0]]          # smallest possible tile; caller raises limit
    multi = [c for c in fitting if extent // c >= min_steps]
    return max(multi) if multi else max(fitting)


# --------------------------------------------------------------------------
# Kernel bodies.
# --------------------------------------------------------------------------
def _tap_window(x, t, *, dil, pad, axis):
    """Reflection-padded tap window of `x` along `axis` for tap `t`, built
    from one interior slice + <=pad single reflected slices (no padded slab)."""
    L = x.shape[axis]
    o = t * dil - pad                                  # signed tap offset

    def sl(lo, hi):
        idx = [slice(None)] * x.ndim
        idx[axis] = slice(lo, hi)
        return x[tuple(idx)]

    if o == 0:
        return x
    if o < 0:                                          # left border reflects
        left = [sl(j, j + 1) for j in range(-o, 0, -1)]        # x[-o] ... x[1]
        return jnp.concatenate(left + [sl(0, L + o)], axis=axis)
    right = [sl(L - 2 - j, L - 1 - j) for j in range(o)]       # x[L-2] ... x[L-1-o]
    return jnp.concatenate([sl(o, L)] + right, axis=axis)


def _strip_att_body(x_ref, res_ref, coef_ref, scal_ref, out_ref, hsum_ref, *,
                    K, dil, pad, lane_strip):
    """One (sample, spatial-tile) block of spatial_strip_att.

    x_ref    : (1, C, TR, W) if lane_strip (strip axis = W, lanes)
               (1, C, H, TR) otherwise     (strip axis = H, sublanes)
    res_ref  : same block as x_ref or None (fused beta * residual)
    coef_ref : (1, C, K)  dynamic-filter taps, A=(ia+1)*ll (and gamma) folded in
    scal_ref : (C, 3)     [B/L, Cc, beta]: out = strip - B/L*sum + Cc*x + beta*res
    out_ref  : same block as x_ref (io dtype)
    hsum_ref : (1, 1, 1, C) per-block channel sums of out (f32), or None
    """
    x = x_ref[0].astype(jnp.float32)                   # (C, R, L) in f32
    coef = coef_ref[0]                                 # (C, K)
    s = scal_ref[...]                                  # (C, 3)
    axis = 2 if lane_strip else 1

    # gap as a plain sum (the 1/L factor is folded into s[:, 0]).
    gsum = jnp.sum(x, axis=axis, keepdims=True)

    # Dynamic strip convolution with reflection padding built per tap.
    strip = None
    for t in range(K):
        c_t = coef[:, t:t + 1][:, :, None]             # (C, 1, 1)
        term = c_t * _tap_window(x, t, dil=dil, pad=pad, axis=axis)
        strip = term if strip is None else strip + term

    Bn = s[:, 0:1][:, :, None]                          # ia*ll/L        [*gamma]
    Cc = s[:, 1:2][:, :, None]                          # lh+1           [*gamma]
    out = strip - Bn * gsum + Cc * x
    if res_ref is not None:
        beta = s[:, 2:3][:, :, None]                    # residual scale
        out = out + beta * res_ref[0].astype(jnp.float32)

    out_ref[0] = out.astype(out_ref.dtype)
    if hsum_ref is not None:
        # Per-channel sums of this block (feeds the W-branch dynamic filter).
        hsum_ref[0, 0, 0] = jnp.sum(jnp.sum(out, axis=2), axis=1)


def _make_kernel(K, dil, pad, lane_strip, has_res, emit_sums):
    if has_res:
        def kernel(x_ref, res_ref, coef_ref, scal_ref, out_ref):
            _strip_att_body(x_ref, res_ref, coef_ref, scal_ref, out_ref, None,
                            K=K, dil=dil, pad=pad, lane_strip=lane_strip)
    elif emit_sums:
        def kernel(x_ref, coef_ref, scal_ref, out_ref, hsum_ref):
            _strip_att_body(x_ref, None, coef_ref, scal_ref, out_ref, hsum_ref,
                            K=K, dil=dil, pad=pad, lane_strip=lane_strip)
    else:
        def kernel(x_ref, coef_ref, scal_ref, out_ref):
            _strip_att_body(x_ref, None, coef_ref, scal_ref, out_ref, None,
                            K=K, dil=dil, pad=pad, lane_strip=lane_strip)
    return kernel


# --------------------------------------------------------------------------
# pallas_call wrapper for one strip-attention branch.
# --------------------------------------------------------------------------
def _strip_att_pallas(x, coef, scal, res, *, K, dil, lane_strip, emit_sums,
                      alias_x_to_out=False):
    N, C, H, W = x.shape
    io_dtype = x.dtype
    io_bytes = jnp.dtype(io_dtype).itemsize
    pad = dil * (K - 1) // 2
    L = W if lane_strip else H
    if pad >= L:
        raise ValueError(f"reflection pad {pad} must be < strip extent {L}")

    vmem_limit, budget = _vmem_limits()
    n_io = 2 + (1 if res is not None else 0)             # x, out (+ res)

    if lane_strip:
        extent = H
        granule = 8 * max(1, 4 // io_bytes)               # sublane granule
        unit_elems = C * W
    else:
        extent = W
        granule = 128                                      # lane granule
        unit_elems = C * H
    # double-buffered io blocks + ~6 block-sized f32 temporaries per unit.
    live_per_unit = unit_elems * (2 * n_io * io_bytes + 6 * 4)
    min_steps = max(1, -(-4 // N))                         # >=~4 parallel steps total
    tile = _choose_tile(extent, granule, live_per_unit, budget, min_steps)
    n_tiles = extent // tile
    # Never silently under-provision: cover the chosen tile's estimate.
    vmem_limit = max(vmem_limit,
                     min(tile * live_per_unit * 3 // 2, 100 * 1024 * 1024))

    if lane_strip:
        blk = (1, C, tile, W)
        imap = lambda n, r: (n, 0, r, 0)
    else:
        blk = (1, C, H, tile)
        imap = lambda n, r: (n, 0, 0, r)

    in_specs = [pl.BlockSpec(blk, imap)]
    args = [x]
    if res is not None:
        in_specs.append(pl.BlockSpec(blk, imap))
        args.append(res)
    in_specs += [
        pl.BlockSpec((1, C, K), lambda n, r: (n, 0, 0)),       # tap coefficients
        pl.BlockSpec((C, scal.shape[1]), lambda n, r: (0, 0)),  # per-channel scales
    ]
    args += [coef, scal]

    out_shape = [jax.ShapeDtypeStruct((N, C, H, W), io_dtype)]
    out_specs = [pl.BlockSpec(blk, imap)]
    if emit_sums:
        out_shape.append(jax.ShapeDtypeStruct((N, n_tiles, 1, C), jnp.float32))
        out_specs.append(pl.BlockSpec((1, 1, 1, C), lambda n, r: (n, r, 0, 0)))

    tensor_bytes = N * C * H * W * io_bytes
    cost = pl.CostEstimate(flops=(2 * K + 6) * N * C * H * W,
                           transcendentals=0,
                           bytes_accessed=n_io * tensor_bytes)

    multi_out = len(out_shape) > 1
    result = pl.pallas_call(
        _make_kernel(K, dil, pad, lane_strip, res is not None, emit_sums),
        out_shape=tuple(out_shape) if multi_out else out_shape[0],
        grid=(N, n_tiles),
        in_specs=in_specs,
        out_specs=tuple(out_specs) if multi_out else out_specs[0],
        compiler_params=pltpu.CompilerParams(
            dimension_semantics=("parallel", "parallel"),
            vmem_limit_bytes=vmem_limit),
        cost_estimate=cost,
        input_output_aliases=({0: 0} if alias_x_to_out else {}),
    )(*args)
    return result


# --------------------------------------------------------------------------
# cubic_attention forward.
# --------------------------------------------------------------------------
def _dyn_filter_coefs(mean_nc, w_conv, G, C, K):
    """tanh(1x1-conv(pooled)) expanded group->channel: (N, C, K)."""
    f = jnp.tanh(mean_nc @ w_conv.T).reshape(-1, G, K)
    return jnp.repeat(f, C // G, axis=1)


def cubic_attention_pallas(x, p, *, G, K, dil, io_dtype=jnp.bfloat16):
    """cubic_attention forward.  x: (N, C, H, W), NCHW like PyTorch.

    io_dtype controls the HBM storage dtype of the large tensors (bf16 halves
    bytes moved on this memory-bound op); all in-kernel math is float32.
    """
    N, C, H, W = x.shape
    x_f32 = x.astype(jnp.float32)
    x_io = x_f32.astype(io_dtype)

    # ---- H branch: strip conv + pooled sum along W (lanes). ----
    mean_x = jnp.mean(x_f32, axis=(2, 3))                               # (N, C)
    coef_h = _dyn_filter_coefs(mean_x, p["conv_h"], G, C, K)
    coef_h = coef_h * ((p["ia_h"] + 1.0) * p["ll_h"])[None, :, None]    # fold A
    scal_h = jnp.stack([p["ia_h"] * p["ll_h"] / W,                      # B/L
                        p["lh_h"] + 1.0,                                # Cc
                        jnp.zeros_like(p["lh_h"])], axis=1).astype(jnp.float32)
    out_h, hsum = _strip_att_pallas(x_io, coef_h, scal_h, None, K=K, dil=dil,
                                    lane_strip=True, emit_sums=True)

    # ---- W branch: strip conv + pooled sum along H; gamma/beta fused. ----
    mean_h = jnp.sum(hsum, axis=(1, 2)) / float(H * W)                  # (N, C)
    coef_w = _dyn_filter_coefs(mean_h, p["conv_w"], G, C, K)
    coef_w = coef_w * (p["gamma"] * (p["ia_w"] + 1.0) * p["ll_w"])[None, :, None]
    scal_w = jnp.stack([p["gamma"] * p["ia_w"] * p["ll_w"] / H,
                        p["gamma"] * (p["lh_w"] + 1.0),
                        p["beta"]], axis=1).astype(jnp.float32)
    return _strip_att_pallas(out_h, coef_w, scal_w, x_io, K=K, dil=dil,
                             lane_strip=False, emit_sums=False,
                             alias_x_to_out=True)


# --------------------------------------------------------------------------
# Pure-JAX reference (mirrors the PyTorch module).
# --------------------------------------------------------------------------
def _strip_att_ref(x, w_conv, ia, ll, lh, *, K, dil, G, horizontal):
    n, c, h, w = x.shape
    pad = dil * (K - 1) // 2
    Cg = c // G
    m = jnp.mean(x, axis=(2, 3))                              # (n, c)
    filt = jnp.tanh(m @ w_conv.T).reshape(n, G, K)            # (n, G, K)
    filt_c = jnp.repeat(filt, Cg, axis=1)                     # (n, c, K)
    if horizontal:
        xp = jnp.pad(x, ((0, 0), (0, 0), (0, 0), (pad, pad)), mode="reflect")
        patches = jnp.stack(
            [xp[:, :, :, t * dil:t * dil + w] for t in range(K)], axis=2)
        gap = jnp.mean(x, axis=3, keepdims=True)
    else:
        xp = jnp.pad(x, ((0, 0), (0, 0), (pad, pad), (0, 0)), mode="reflect")
        patches = jnp.stack(
            [xp[:, :, t * dil:t * dil + h, :] for t in range(K)], axis=2)
        gap = jnp.mean(x, axis=2, keepdims=True)
    out = jnp.sum(patches * filt_c[:, :, :, None, None], axis=2)
    ia_b = ia[None, :, None, None]
    out_low = (out * (ia_b + 1.0) - ia_b * gap) * ll[None, :, None, None]
    out_high = x * (lh[None, :, None, None] + 1.0)
    return out_low + out_high


def cubic_attention_ref(x, p, *, G, K, dil):
    o = _strip_att_ref(x, p["conv_h"], p["ia_h"], p["ll_h"], p["lh_h"],
                       K=K, dil=dil, G=G, horizontal=True)
    o = _strip_att_ref(o, p["conv_w"], p["ia_w"], p["ll_w"], p["lh_w"],
                       K=K, dil=dil, G=G, horizontal=False)
    return (p["gamma"][None, :, None, None] * o
            + x * p["beta"][None, :, None, None])


# --------------------------------------------------------------------------
if __name__ == "__main__":
    N, C, H, W = 2, 8, 16, 24          # non-square to exercise both axes
    G, K = 2, 3

    key = jax.random.PRNGKey(0)
    keys = jax.random.split(key, 12)
    x = jax.random.normal(keys[0], (N, C, H, W), jnp.float32)

    def pinit(k, shape, scale):
        return scale * jax.random.normal(k, shape, jnp.float32)

    # Deterministic synthetic parameters (module defaults are all-zero, which
    # makes the op near-identity; small random values exercise the math).
    params = dict(
        conv_h=pinit(keys[1], (G * K, C), 1.0 / (C ** 0.5)),
        ia_h=pinit(keys[2], (C,), 0.3),
        ll_h=pinit(keys[3], (C,), 0.3),
        lh_h=pinit(keys[4], (C,), 0.3),
        conv_w=pinit(keys[5], (G * K, C), 1.0 / (C ** 0.5)),
        ia_w=pinit(keys[6], (C,), 0.3),
        ll_w=pinit(keys[7], (C,), 0.3),
        lh_w=pinit(keys[8], (C,), 0.3),
        gamma=pinit(keys[9], (C,), 0.5),
        beta=1.0 + pinit(keys[10], (C,), 0.1),
    )

    # ---- f32 I/O path: tight elementwise check (dilation 1 and 3). ----
    for dil in (1, 3):
        ref = cubic_attention_ref(x, params, G=G, K=K, dil=dil)
        run32 = jax.jit(functools.partial(cubic_attention_pallas,
                                          G=G, K=K, dil=dil,
                                          io_dtype=jnp.float32))
        out32 = jax.block_until_ready(run32(x, params))
        assert out32.shape == x.shape and out32.dtype == jnp.float32
        err = float(jnp.max(jnp.abs(out32 - ref)))
        assert jnp.allclose(out32, ref, atol=2e-3, rtol=2e-3), (dil, err)

    # ---- bf16 I/O path (bandwidth mode): relative-error check. ----
    dil = 1
    ref = cubic_attention_ref(x, params, G=G, K=K, dil=dil)
    run16 = jax.jit(functools.partial(cubic_attention_pallas,
                                      G=G, K=K, dil=dil,
                                      io_dtype=jnp.bfloat16))
    out16 = jax.block_until_ready(run16(x, params))
    assert out16.shape == x.shape and out16.dtype == jnp.bfloat16
    out16_f = out16.astype(jnp.float32)
    rel = float(jnp.linalg.norm(out16_f - ref)
                / (float(jnp.linalg.norm(ref)) + 1e-12))
    assert rel < 3e-2, rel

    print("KERNEL_OK")
</pallas_src>

<mosaic_0001>
module attributes {stable_mosaic.version = 11 : i64} {
  func.func @kernel(%arg0: i32, %arg1: i32, %arg2: memref<1x8x8x24xf32, #tpu.memory_space<vmem>>, %arg3: memref<1x8x3xf32, #tpu.memory_space<vmem>>, %arg4: memref<8x3xf32, #tpu.memory_space<vmem>>, %arg5: memref<1x8x8x24xf32, #tpu.memory_space<vmem>>, %arg6: memref<1x1x1x8xf32, #tpu.memory_space<vmem>>) attributes {dimension_semantics = [#tpu.dimension_semantics<parallel>, #tpu.dimension_semantics<parallel>], iteration_bounds = array<i64: 2, 2>, scalar_prefetch = 0 : i64, scratch_operands = 0 : i64, tpu.core_type = #tpu.core_type<tc>, window_params = [{transform_indices = @transform_0, window_bounds = array<i64: 1, 8, 8, 24>}, {transform_indices = @transform_1, window_bounds = array<i64: 1, 8, 3>}, {pipeline_mode = #tpu.pipeline_mode<synchronous>, transform_indices = @transform_2, window_bounds = array<i64: 8, 3>}, {transform_indices = @transform_3, window_bounds = array<i64: 1, 8, 8, 24>}, {transform_indices = @transform_4, window_bounds = array<i64: 1, 1, 1, 8>}]} {
    %c0 = arith.constant 0 : index
    %c0_0 = arith.constant 0 : index
    %c0_1 = arith.constant 0 : index
    %c0_2 = arith.constant 0 : index
    %0 = vector.load %arg2[%c0, %c0_0, %c0_1, %c0_2] : memref<1x8x8x24xf32, #tpu.memory_space<vmem>>, vector<1x8x8x24xf32>
    %1 = vector.shape_cast %0 : vector<1x8x8x24xf32> to vector<8x8x24xf32>
    %c0_3 = arith.constant 0 : index
    %c0_4 = arith.constant 0 : index
    %c0_5 = arith.constant 0 : index
    %2 = vector.load %arg3[%c0_3, %c0_4, %c0_5] : memref<1x8x3xf32, #tpu.memory_space<vmem>>, vector<1x8x3xf32>
    %3 = vector.shape_cast %2 : vector<1x8x3xf32> to vector<8x3xf32>
    %c0_6 = arith.constant 0 : index
    %c0_7 = arith.constant 0 : index
    %4 = vector.load %arg4[%c0_6, %c0_7] : memref<8x3xf32, #tpu.memory_space<vmem>>, vector<8x3xf32>
    %cst = arith.constant dense<0.000000e+00> : vector<8x8xf32>
    %5 = vector.multi_reduction <add>, %1, %cst [2] : vector<8x8x24xf32> to vector<8x8xf32>
    %6 = vector.shape_cast %5 : vector<8x8xf32> to vector<8x8x1xf32>
    %7 = vector.extract_strided_slice %3 {offsets = [0, 0], sizes = [8, 1], strides = [1, 1]} : vector<8x3xf32> to vector<8x1xf32>
    %8 = vector.shape_cast %7 : vector<8x1xf32> to vector<8x1x1xf32>
    %9 = vector.extract_strided_slice %1 {offsets = [0, 0, 1], sizes = [8, 8, 1], strides = [1, 1, 1]} : vector<8x8x24xf32> to vector<8x8x1xf32>
    %10 = vector.extract_strided_slice %1 {offsets = [0, 0, 0], sizes = [8, 8, 23], strides = [1, 1, 1]} : vector<8x8x24xf32> to vector<8x8x23xf32>
    %11 = tpu.concatenate %9, %10 in 2 : vector<8x8x1xf32>, vector<8x8x23xf32> -> vector<8x8x24xf32>
    %12 = vector.broadcast %8 : vector<8x1x1xf32> to vector<8x8x24xf32>
    %13 = arith.mulf %12, %11 : vector<8x8x24xf32>
    %14 = vector.extract_strided_slice %3 {offsets = [0, 1], sizes = [8, 1], strides = [1, 1]} : vector<8x3xf32> to vector<8x1xf32>
    %15 = vector.shape_cast %14 : vector<8x1xf32> to vector<8x1x1xf32>
    %16 = vector.broadcast %15 : vector<8x1x1xf32> to vector<8x8x24xf32>
    %17 = arith.mulf %16, %1 : vector<8x8x24xf32>
    %18 = arith.addf %13, %17 : vector<8x8x24xf32>
    %19 = vector.extract_strided_slice %3 {offsets = [0, 2], sizes = [8, 1], strides = [1, 1]} : vector<8x3xf32> to vector<8x1xf32>
    %20 = vector.shape_cast %19 : vector<8x1xf32> to vector<8x1x1xf32>
    %21 = vector.extract_strided_slice %1 {offsets = [0, 0, 22], sizes = [8, 8, 1], strides = [1, 1, 1]} : vector<8x8x24xf32> to vector<8x8x1xf32>
    %22 = vector.extract_strided_slice %1 {offsets = [0, 0, 1], sizes = [8, 8, 23], strides = [1, 1, 1]} : vector<8x8x24xf32> to vector<8x8x23xf32>
    %23 = tpu.concatenate %22, %21 in 2 : vector<8x8x23xf32>, vector<8x8x1xf32> -> vector<8x8x24xf32>
    %24 = vector.broadcast %20 : vector<8x1x1xf32> to vector<8x8x24xf32>
    %25 = arith.mulf %24, %23 : vector<8x8x24xf32>
    %26 = arith.addf %18, %25 : vector<8x8x24xf32>
    %27 = vector.extract_strided_slice %4 {offsets = [0, 0], sizes = [8, 1], strides = [1, 1]} : vector<8x3xf32> to vector<8x1xf32>
    %28 = vector.shape_cast %27 : vector<8x1xf32> to vector<8x1x1xf32>
    %29 = vector.extract_strided_slice %4 {offsets = [0, 1], sizes = [8, 1], strides = [1, 1]} : vector<8x3xf32> to vector<8x1xf32>
    %30 = vector.shape_cast %29 : vector<8x1xf32> to vector<8x1x1xf32>
    %31 = vector.broadcast %28 : vector<8x1x1xf32> to vector<8x8x1xf32>
    %32 = arith.mulf %31, %6 : vector<8x8x1xf32>
    %33 = vector.broadcast %32 : vector<8x8x1xf32> to vector<8x8x24xf32>
    %34 = arith.subf %26, %33 : vector<8x8x24xf32>
    %35 = vector.broadcast %30 : vector<8x1x1xf32> to vector<8x8x24xf32>
    %36 = arith.mulf %35, %1 : vector<8x8x24xf32>
    %37 = arith.addf %34, %36 : vector<8x8x24xf32>
    %c0_8 = arith.constant 0 : index
    %c0_9 = arith.constant 0 : index
    %c0_10 = arith.constant 0 : index
    %c0_11 = arith.constant 0 : index
    %38 = vector.load %arg5[%c0_8, %c0_9, %c0_10, %c0_11] : memref<1x8x8x24xf32, #tpu.memory_space<vmem>>, vector<1x8x8x24xf32>
    %39 = vector.shape_cast %38 : vector<1x8x8x24xf32> to vector<8x8x24xf32>
    %40 = vector.shape_cast %37 : vector<8x8x24xf32> to vector<1x8x8x24xf32>
    tpu.vector_store %arg5[%c0_8, %c0_9, %c0_10, %c0_11], %40 {strides = array<i32>} : memref<1x8x8x24xf32, #tpu.memory_space<vmem>>, vector<1x8x8x24xf32>,
    %cst_12 = arith.constant dense<0.000000e+00> : vector<8x8xf32>
    %41 = vector.multi_reduction <add>, %37, %cst_12 [2] : vector<8x8x24xf32> to vector<8x8xf32>
    %cst_13 = arith.constant dense<0.000000e+00> : vector<8xf32>
    %42 = vector.multi_reduction <add>, %41, %cst_13 [1] : vector<8x8xf32> to vector<8xf32>
    %c0_14 = arith.constant 0 : index
    %c0_15 = arith.constant 0 : index
    %c0_16 = arith.constant 0 : index
    %c0_17 = arith.constant 0 : index
    %43 = vector.load %arg6[%c0_14, %c0_15, %c0_16, %c0_17] : memref<1x1x1x8xf32, #tpu.memory_space<vmem>>, vector<1x1x1x8xf32>
    %44 = vector.shape_cast %43 : vector<1x1x1x8xf32> to vector<8xf32>
    %45 = vector.shape_cast %42 : vector<8xf32> to vector<1x1x1x8xf32>
    tpu.vector_store %arg6[%c0_14, %c0_15, %c0_16, %c0_17], %45 {strides = array<i32>} : memref<1x1x1x8xf32, #tpu.memory_space<vmem>>, vector<1x1x1x8xf32>,
    return
  }
  func.func @transform_0(%arg0: i32, %arg1: i32) -> (i32, i32, i32, i32) {
    %c0_i32 = arith.constant 0 : i32
    %c0_i32_0 = arith.constant 0 : i32
    %c0_i32_1 = arith.constant 0 : i32
    return %arg0, %c0_i32, %arg1, %c0_i32_0 : i32, i32, i32, i32
  }
  func.func @transform_1(%arg0: i32, %arg1: i32) -> (i32, i32, i32) {
    %c0_i32 = arith.constant 0 : i32
    %c0_i32_0 = arith.constant 0 : i32
    %c0_i32_1 = arith.constant 0 : i32
    return %arg0, %c0_i32, %c0_i32_0 : i32, i32, i32
  }
  func.func @transform_2(%arg0: i32, %arg1: i32) -> (i32, i32) {
    %c0_i32 = arith.constant 0 : i32
    %c0_i32_0 = arith.constant 0 : i32
    %c0_i32_1 = arith.constant 0 : i32
    return %c0_i32, %c0_i32_0 : i32, i32
  }
  func.func @transform_3(%arg0: i32, %arg1: i32) -> (i32, i32, i32, i32) {
    %c0_i32 = arith.constant 0 : i32
    %c0_i32_0 = arith.constant 0 : i32
    %c0_i32_1 = arith.constant 0 : i32
    return %arg0, %c0_i32, %arg1, %c0_i32_0 : i32, i32, i32, i32
  }
  func.func @transform_4(%arg0: i32, %arg1: i32) -> (i32, i32, i32, i32) {
    %c0_i32 = arith.constant 0 : i32
    %c0_i32_0 = arith.constant 0 : i32
    %c0_i32_1 = arith.constant 0 : i32
    return %arg0, %arg1, %c0_i32, %c0_i32_0 : i32, i32, i32, i32
  }
}

module attributes {stable_mosaic.version = 11 : i64} {
  func.func @kernel(%arg0: i32, %arg1: i32, %arg2: memref<1x8x16x24xf32, #tpu.memory_space<vmem>>, %arg3: memref<1x8x16x24xf32, #tpu.memory_space<vmem>>, %arg4: memref<1x8x3xf32, #tpu.memory_space<vmem>>, %arg5: memref<8x3xf32, #tpu.memory_space<vmem>>, %arg6: memref<1x8x16x24xf32, #tpu.memory_space<vmem>>) attributes {dimension_semantics = [#tpu.dimension_semantics<parallel>, #tpu.dimension_semantics<parallel>], iteration_bounds = array<i64: 2, 1>, scalar_prefetch = 0 : i64, scratch_operands = 0 : i64, tpu.core_type = #tpu.core_type<tc>, window_params = [{transform_indices = @transform_0, window_bounds = array<i64: 1, 8, 16, 24>}, {transform_indices = @transform_1, window_bounds = array<i64: 1, 8, 16, 24>}, {transform_indices = @transform_2, window_bounds = array<i64: 1, 8, 3>}, {pipeline_mode = #tpu.pipeline_mode<synchronous>, transform_indices = @transform_3, window_bounds = array<i64: 8, 3>}, {transform_indices = @transform_4, window_bounds = array<i64: 1, 8, 16, 24>}]} {
    %c0 = arith.constant 0 : index
    %c0_0 = arith.constant 0 : index
    %c0_1 = arith.constant 0 : index
    %c0_2 = arith.constant 0 : index
    %0 = vector.load %arg2[%c0, %c0_0, %c0_1, %c0_2] : memref<1x8x16x24xf32, #tpu.memory_space<vmem>>, vector<1x8x16x24xf32>
    %1 = vector.shape_cast %0 : vector<1x8x16x24xf32> to vector<8x16x24xf32>
    %c0_3 = arith.constant 0 : index
    %c0_4 = arith.constant 0 : index
    %c0_5 = arith.constant 0 : index
    %2 = vector.load %arg4[%c0_3, %c0_4, %c0_5] : memref<1x8x3xf32, #tpu.memory_space<vmem>>, vector<1x8x3xf32>
    %3 = vector.shape_cast %2 : vector<1x8x3xf32> to vector<8x3xf32>
    %c0_6 = arith.constant 0 : index
    %c0_7 = arith.constant 0 : index
    %4 = vector.load %arg5[%c0_6, %c0_7] : memref<8x3xf32, #tpu.memory_space<vmem>>, vector<8x3xf32>
    %cst = arith.constant dense<0.000000e+00> : vector<8x24xf32>
    %5 = vector.multi_reduction <add>, %1, %cst [1] : vector<8x16x24xf32> to vector<8x24xf32>
    %6 = vector.shape_cast %5 : vector<8x24xf32> to vector<8x1x24xf32>
    %7 = vector.extract_strided_slice %3 {offsets = [0, 0], sizes = [8, 1], strides = [1, 1]} : vector<8x3xf32> to vector<8x1xf32>
    %8 = vector.shape_cast %7 : vector<8x1xf32> to vector<8x1x1xf32>
    %9 = vector.extract_strided_slice %1 {offsets = [0, 1, 0], sizes = [8, 1, 24], strides = [1, 1, 1]} : vector<8x16x24xf32> to vector<8x1x24xf32>
    %10 = vector.extract_strided_slice %1 {offsets = [0, 0, 0], sizes = [8, 15, 24], strides = [1, 1, 1]} : vector<8x16x24xf32> to vector<8x15x24xf32>
    %11 = tpu.concatenate %9, %10 in 1 : vector<8x1x24xf32>, vector<8x15x24xf32> -> vector<8x16x24xf32>
    %12 = vector.broadcast %8 : vector<8x1x1xf32> to vector<8x16x24xf32>
    %13 = arith.mulf %12, %11 : vector<8x16x24xf32>
    %14 = vector.extract_strided_slice %3 {offsets = [0, 1], sizes = [8, 1], strides = [1, 1]} : vector<8x3xf32> to vector<8x1xf32>
    %15 = vector.shape_cast %14 : vector<8x1xf32> to vector<8x1x1xf32>
    %16 = vector.broadcast %15 : vector<8x1x1xf32> to vector<8x16x24xf32>
    %17 = arith.mulf %16, %1 : vector<8x16x24xf32>
    %18 = arith.addf %13, %17 : vector<8x16x24xf32>
    %19 = vector.extract_strided_slice %3 {offsets = [0, 2], sizes = [8, 1], strides = [1, 1]} : vector<8x3xf32> to vector<8x1xf32>
    %20 = vector.shape_cast %19 : vector<8x1xf32> to vector<8x1x1xf32>
    %21 = vector.extract_strided_slice %1 {offsets = [0, 14, 0], sizes = [8, 1, 24], strides = [1, 1, 1]} : vector<8x16x24xf32> to vector<8x1x24xf32>
    %22 = vector.extract_strided_slice %1 {offsets = [0, 1, 0], sizes = [8, 15, 24], strides = [1, 1, 1]} : vector<8x16x24xf32> to vector<8x15x24xf32>
    %23 = tpu.concatenate %22, %21 in 1 : vector<8x15x24xf32>, vector<8x1x24xf32> -> vector<8x16x24xf32>
    %24 = vector.broadcast %20 : vector<8x1x1xf32> to vector<8x16x24xf32>
    %25 = arith.mulf %24, %23 : vector<8x16x24xf32>
    %26 = arith.addf %18, %25 : vector<8x16x24xf32>
    %27 = vector.extract_strided_slice %4 {offsets = [0, 0], sizes = [8, 1], strides = [1, 1]} : vector<8x3xf32> to vector<8x1xf32>
    %28 = vector.shape_cast %27 : vector<8x1xf32> to vector<8x1x1xf32>
    %29 = vector.extract_strided_slice %4 {offsets = [0, 1], sizes = [8, 1], strides = [1, 1]} : vector<8x3xf32> to vector<8x1xf32>
    %30 = vector.shape_cast %29 : vector<8x1xf32> to vector<8x1x1xf32>
    %31 = vector.broadcast %28 : vector<8x1x1xf32> to vector<8x1x24xf32>
    %32 = arith.mulf %31, %6 : vector<8x1x24xf32>
    %33 = vector.broadcast %32 : vector<8x1x24xf32> to vector<8x16x24xf32>
    %34 = arith.subf %26, %33 : vector<8x16x24xf32>
    %35 = vector.broadcast %30 : vector<8x1x1xf32> to vector<8x16x24xf32>
    %36 = arith.mulf %35, %1 : vector<8x16x24xf32>
    %37 = arith.addf %34, %36 : vector<8x16x24xf32>
    %38 = vector.extract_strided_slice %4 {offsets = [0, 2], sizes = [8, 1], strides = [1, 1]} : vector<8x3xf32> to vector<8x1xf32>
    %39 = vector.shape_cast %38 : vector<8x1xf32> to vector<8x1x1xf32>
    %c0_8 = arith.constant 0 : index
    %c0_9 = arith.constant 0 : index
    %c0_10 = arith.constant 0 : index
    %c0_11 = arith.constant 0 : index
    %40 = vector.load %arg3[%c0_8, %c0_9, %c0_10, %c0_11] : memref<1x8x16x24xf32, #tpu.memory_space<vmem>>, vector<1x8x16x24xf32>
    %41 = vector.shape_cast %40 : vector<1x8x16x24xf32> to vector<8x16x24xf32>
    %42 = vector.broadcast %39 : vector<8x1x1xf32> to vector<8x16x24xf32>
    %43 = arith.mulf %42, %41 : vector<8x16x24xf32>
    %44 = arith.addf %37, %43 : vector<8x16x24xf32>
    %c0_12 = arith.constant 0 : index
    %c0_13 = arith.constant 0 : index
    %c0_14 = arith.constant 0 : index
    %c0_15 = arith.constant 0 : index
    %45 = vector.load %arg6[%c0_12, %c0_13, %c0_14, %c0_15] : memref<1x8x16x24xf32, #tpu.memory_space<vmem>>, vector<1x8x16x24xf32>
    %46 = vector.shape_cast %45 : vector<1x8x16x24xf32> to vector<8x16x24xf32>
    %47 = vector.shape_cast %44 : vector<8x16x24xf32> to vector<1x8x16x24xf32>
    tpu.vector_store %arg6[%c0_12, %c0_13, %c0_14, %c0_15], %47 {strides = array<i32>} : memref<1x8x16x24xf32, #tpu.memory_space<vmem>>, vector<1x8x16x24xf32>,
    return
  }
  func.func @transform_0(%arg0: i32, %arg1: i32) -> (i32, i32, i32, i32) {
    %c0_i32 = arith.constant 0 : i32
    %c0_i32_0 = arith.constant 0 : i32
    %c0_i32_1 = arith.constant 0 : i32
    return %arg0, %c0_i32, %c0_i32_0, %arg1 : i32, i32, i32, i32
  }
  func.func @transform_1(%arg0: i32, %arg1: i32) -> (i32, i32, i32, i32) {
    %c0_i32 = arith.constant 0 : i32
    %c0_i32_0 = arith.constant 0 : i32
    %c0_i32_1 = arith.constant 0 : i32
    return %arg0, %c0_i32, %c0_i32_0, %arg1 : i32, i32, i32, i32
  }
  func.func @transform_2(%arg0: i32, %arg1: i32) -> (i32, i32, i32) {
    %c0_i32 = arith.constant 0 : i32
    %c0_i32_0 = arith.constant 0 : i32
    %c0_i32_1 = arith.constant 0 : i32
    return %arg0, %c0_i32, %c0_i32_0 : i32, i32, i32
  }
  func.func @transform_3(%arg0: i32, %arg1: i32) -> (i32, i32) {
    %c0_i32 = arith.constant 0 : i32
    %c0_i32_0 = arith.constant 0 : i32
    %c0_i32_1 = arith.constant 0 : i32
    return %c0_i32, %c0_i32_0 : i32, i32
  }
  func.func @transform_4(%arg0: i32, %arg1: i32) -> (i32, i32, i32, i32) {
    %c0_i32 = arith.constant 0 : i32
    %c0_i32_0 = arith.constant 0 : i32
    %c0_i32_1 = arith.constant 0 : i32
    return %arg0, %c0_i32, %c0_i32_0, %arg1 : i32, i32, i32, i32
  }
}

</mosaic_0001>

<llo_original>
// kernel: cubic_attention_pallas.2
$region0: #{cubic_attention_pallas.2}
  #allocation0 [shape = 'u32[]', space=smem, size = 0x4, offset = 0x4, fixed_abs, tag = 'smem constant byte address 0x4 - core index']
  #allocation1 [shape = 'u32[72,128]{1,0:T(1,128)}', space=vmem, size = 0x9000, scoped, tag = 'internal scratch']
  %s0 = inlined_call_operand.vmem [shape: f32[2,8,16,24], index: 0, kind: input, shape index: {}]
  %s1 = inlined_call_operand.vmem [shape: f32[2,8,3], index: 1, kind: input, shape index: {}]
  %s2 = inlined_call_operand.vmem [shape: f32[8,3], index: 2, kind: input, shape index: {}]
  %s3 = inlined_call_operand.hbm [shape: f32[2,8,16,24], index: 3, kind: output, shape index: {0}]
  %s4 = inlined_call_operand.vmem [shape: f32[2,2,1,8], index: 4, kind: output, shape index: {1}]
  %5 = xla_tuple %s3, %s4
  %s6 = sld [smem:[#allocation0]]
  $region91: #{cubic_attention_pallas.2} parent=0
    _
  %s8 = ssub.s32 1, %s6
  %s9 = scalar_select 0, %s8, %s6
  $region1: #{cubic_attention_pallas.2} parent=0
    #allocation2 [shape = 'u8[65536]{0}', space=vmem, size = 0x10000, scoped, tag = 'input window, operand 0']
    #allocation3 [shape = 'u8[65536]{0}', space=vmem, size = 0x10000, scoped, tag = 'output window, operand 0']
    #allocation4 [shape = 's32[2]{0}', space=sflag, size = 0x8, scoped, tag = 'scoped memory for cubic_attention_pallas.2']
    %10 = vsyncpa [#allocation4], 0
    %s11 = scalar_lea.sflag [#allocation4], 1
    %12 = vsyncpa %s11, 0
    loop: start=0, step=1, limit=6
    $region2: #{cubic_attention_pallas.2} parent=1 // loop_pre_header
      _
    $region3: #{cubic_attention_pallas.2} parent=1 // loop_header
      %s14 = sphi 0, %s18
      %p15 = scmp.ge.s32.totalorder %s14, 6
      %s21 = sphi 0, %s33
      %s22 = sphi 0, %s29
      %s23 = sphi 0, %s21
      %s24 = sphi 0, %s22
      %s25 = sphi 0, %s23
      %s26 = sphi 0, %s24
      %s38 = sphi 0, %s40
      %s41 = sphi 0, %s38
      %s42 = sphi 0, %s41
      %s58 = sphi 0, %s42
      %s64 = sphi 0, %s66
      %s67 = sphi 0, %s64
      %s68 = sphi 0, %s67
      %s84 = sphi 0, %s68
      %s88 = sphi 0, %s88
      %s90 = sphi 0, %s88
      %s91 = sphi 0, %s90
      %s105 = sphi 0, %s91
      %s113 = sphi 0, %s115
      %s116 = sphi 0, %s113
      %s117 = sphi 0, %s116
      %s133 = sphi 0, %s117
      %s141 = sphi 0, %s143
      %s144 = sphi 0, %s141
      %s145 = sphi 0, %s144
      %s161 = sphi 0, %s145
    $region4: #{cubic_attention_pallas.2} parent=1 // loop_header_branch
      %17 = sbr.rel (%p15) target = $region8
    $region5: #{cubic_attention_pallas.2} parent=1 // loop_body
      %s19 = ssub.s32 %s14, 1
      %s20 = ssub.s32 %s14, 2
      %s27 = sadd.s32 1, %s22
      %p28 = scmp.ge.s32.totalorder %s27, 2
      %s29 = scalar_select %p28, 0, %s27
      %s30 = sadd.s32 1, %s21
      %s31 = scalar_select %p28, %s30, %s21
      %p32 = scmp.ge.s32.totalorder %s31, 2
      %s33 = scalar_select %p32, 0, %s31
      %s34 = ssub.s32 %s21, %s33
      %s35 = ssub.s32 %s22, %s29
      %s36 = sor.u32 %s34, %s35
      %p37 = scmp.eq.s32.totalorder %s36, 0
      %s39 = sadd.s32 %s38, 1
      %s40 = scalar_select %p37, %s38, %s39
      %p43 = pneg %p37
      %p44 = scmp.eq.s32.totalorder %s14, 3
      %p45 = por %p43, %p44
      %p46 = scmp.ne.s32.totalorder %s38, %s41
      %p47 = scmp.eq.s32.totalorder %s14, 0
      %p48 = por %p46, %p47
      %p49 = scmp.ne.s32.totalorder %s38, %s41
      %p50 = scmp.eq.s32.totalorder %s19, 3
      %p51 = por %p49, %p50
      %p52 = scmp.ne.s32.totalorder %s41, %s42
      %p53 = scmp.eq.s32.totalorder %s19, 0
      %p54 = por %p52, %p53
      %p55 = scmp.ne.s32.totalorder %s41, %s42
      %p56 = scmp.eq.s32.totalorder %s20, 3
      %p57 = por %p55, %p56
      %p59 = scmp.ne.s32.totalorder %s42, %s58
      %p60 = scmp.eq.s32.totalorder %s20, 0
      %p61 = por %p59, %p60
      %s62 = ssub.s32 %s21, %s33
      %p63 = scmp.eq.s32.totalorder %s62, 0
      %s65 = sadd.s32 %s64, 1
      %s66 = scalar_select %p63, %s64, %s65
      %p69 = pneg %p63
      %p70 = scmp.eq.s32.totalorder %s14, 3
      %p71 = por %p69, %p70
      %p72 = scmp.ne.s32.totalorder %s64, %s67
      %p73 = scmp.eq.s32.totalorder %s14, 0
      %p74 = por %p72, %p73
      %p75 = scmp.ne.s32.totalorder %s64, %s67
      %p76 = scmp.eq.s32.totalorder %s19, 3
      %p77 = por %p75, %p76
      %p78 = scmp.ne.s32.totalorder %s67, %s68
      %p79 = scmp.eq.s32.totalorder %s19, 0
      %p80 = por %p78, %p79
      %p81 = scmp.ne.s32.totalorder %s67, %s68
      %p82 = scmp.eq.s32.totalorder %s20, 3
      %p83 = por %p81, %p82
      %p85 = scmp.ne.s32.totalorder %s68, %s84
      %p86 = scmp.eq.s32.totalorder %s20, 0
      %p87 = por %p85, %p86
      %s89 = sadd.s32 %s88, 1
      %p92 = scmp.eq.s32.totalorder %s14, 3
      %p93 = scmp.ne.s32.totalorder %s88, %s90
      %p94 = scmp.eq.s32.totalorder %s14, 0
      %p95 = por %p93, %p94
      %p96 = scmp.ne.s32.totalorder %s88, %s90
      %p97 = scmp.eq.s32.totalorder %s19, 3
      %p98 = por %p96, %p97
      %p99 = scmp.ne.s32.totalorder %s90, %s91
      %p100 = scmp.eq.s32.totalorder %s19, 0
      %p101 = por %p99, %p100
      %p102 = scmp.ne.s32.totalorder %s90, %s91
      %p103 = scmp.eq.s32.totalorder %s20, 3
      %p104 = por %p102, %p103
      %p106 = scmp.ne.s32.totalorder %s91, %s105
      %p107 = scmp.eq.s32.totalorder %s20, 0
      %p108 = por %p106, %p107
      %s109 = ssub.s32 %s21, %s33
      %s110 = ssub.s32 %s22, %s29
      %s111 = sor.u32 %s109, %s110
      %p112 = scmp.eq.s32.totalorder %s111, 0
      %s114 = sadd.s32 %s113, 1
      %s115 = scalar_select %p112, %s113, %s114
      %p118 = pneg %p112
      %p119 = scmp.eq.s32.totalorder %s14, 3
      %p120 = por %p118, %p119
      %p121 = scmp.ne.s32.totalorder %s113, %s116
      %p122 = scmp.eq.s32.totalorder %s14, 0
      %p123 = por %p121, %p122
      %p124 = scmp.ne.s32.totalorder %s113, %s116
      %p125 = scmp.eq.s32.totalorder %s19, 3
      %p126 = por %p124, %p125
      %p127 = scmp.ne.s32.totalorder %s116, %s117
      %p128 = scmp.eq.s32.totalorder %s19, 0
      %p129 = por %p127, %p128
      %p130 = scmp.ne.s32.totalorder %s116, %s117
      %p131 = scmp.eq.s32.totalorder %s20, 3
      %p132 = por %p130, %p131
      %p134 = scmp.ne.s32.totalorder %s117, %s133
      %p135 = scmp.eq.s32.totalorder %s20, 0
      %p136 = por %p134, %p135
      %s137 = ssub.s32 %s21, %s33
      %s138 = ssub.s32 %s22, %s29
      %s139 = sor.u32 %s137, %s138
      %p140 = scmp.eq.s32.totalorder %s139, 0
      %s142 = sadd.s32 %s141, 1
      %s143 = scalar_select %p140, %s141, %s142
      %p146 = pneg %p140
      %p147 = scmp.eq.s32.totalorder %s14, 3
      %p148 = por %p146, %p147
      %p149 = scmp.ne.s32.totalorder %s141, %s144
      %p150 = scmp.eq.s32.totalorder %s14, 0
      %p151 = por %p149, %p150
      %p152 = scmp.ne.s32.totalorder %s141, %s144
      %p153 = scmp.eq.s32.totalorder %s19, 3
      %p154 = por %p152, %p153
      %p155 = scmp.ne.s32.totalorder %s144, %s145
      %p156 = scmp.eq.s32.totalorder %s19, 0
      %p157 = por %p155, %p156
      %p158 = scmp.ne.s32.totalorder %s144, %s145
      %p159 = scmp.eq.s32.totalorder %s20, 3
      %p160 = por %p158, %p159
      %p162 = scmp.ne.s32.totalorder %s145, %s161
      %p163 = scmp.eq.s32.totalorder %s20, 0
      %p164 = por %p162, %p163
      %p165 = scmp.le.s32.totalorder 1, %s14
      %p166 = scmp.lt.s32.totalorder %s14, 5
      %p167 = pnand %p165, %p166
      %p168 = pneg %p167
      // Predicated region
      $region9: #{cubic_attention_pallas.2} parent=5 // pred_check
        _
      $region10: #{cubic_attention_pallas.2} parent=5 // pred_check_branch
        %170 = sbr.rel (%p167) target = $region12
      $region11: #{cubic_attention_pallas.2} parent=5 // pred_region
        %s171 = ssub.s32 %s14, 1
        // Predicated region
        $region13: #{cubic_attention_pallas.2} parent=11 // pred_check
          %p172 = pneg %p101
        $region14: #{cubic_attention_pallas.2} parent=11 // pred_check_branch
          %174 = sbr.rel (%p172) target = $region16
        $region15: #{cubic_attention_pallas.2} parent=11 // pred_region
          _
        $region16: #{cubic_attention_pallas.2} parent=11 // pred_fallthru
          _
      $region12: #{cubic_attention_pallas.2} parent=5 // pred_fallthru
        _
      %p175 = scmp.lt.s32.totalorder %s14, 4
      // Predicated region
      $region17: #{cubic_attention_pallas.2} parent=5 // pred_check
        %p176 = pneg %p175
      $region18: #{cubic_attention_pallas.2} parent=5 // pred_check_branch
        %178 = sbr.rel (%p176) target = $region20
      $region19: #{cubic_attention_pallas.2} parent=5 // pred_region
        // Predicated region
        $region21: #{cubic_attention_pallas.2} parent=19 // pred_check
          %p179 = pneg %p48
        $region22: #{cubic_attention_pallas.2} parent=19 // pred_check_branch
          %181 = sbr.rel (%p179) target = $region24
        $region23: #{cubic_attention_pallas.2} parent=19 // pred_region
          %s182 = sand.u32 %s38, 1
          %s183 = sand.u32 %s38, 1
          %s184 = smul.addr %s183, 64
          %s185 = scalar_lea.vmem [#allocation2], %s184
          %s186 = smul.addr %s21, 16
          %s187 = sadd.s32 %s22, %s186
          %s188 = smul.addr %s187, 8
          %s189 = scalar_lea.vmem %s0, %s188
          // Predicated region
          $region25: #{cubic_attention_pallas.2} parent=23 // pred_check
            _
          $region26: #{cubic_attention_pallas.2} parent=23 // pred_check_branch
            %191 = sbr.rel (0) target = $region28
          $region27: #{cubic_attention_pallas.2} parent=23 // pred_region
            // Predicated region
            $region29: #{cubic_attention_pallas.2} parent=27 // pred_check
              _
            $region30: #{cubic_attention_pallas.2} parent=27 // pred_check_branch
              %193 = sbr.rel (0) target = $region32
            $region31: #{cubic_attention_pallas.2} parent=27 // pred_region
              // Predicated region
              $region44: #{cubic_attention_pallas.2} parent=31 // pred_check
                _
              $region45: #{cubic_attention_pallas.2} parent=31 // pred_check_branch
                %223 = sbr.rel (0) target = $region47
              $region46: #{cubic_attention_pallas.2} parent=31 // pred_region
                loop: start=0, step=1, limit=1
                $region48: #{cubic_attention_pallas.2} parent=46 // loop_pre_header
                  _
                $region49: #{cubic_attention_pallas.2} parent=46 // loop_header
                  %s225 = sphi 0, %s229
                  %p226 = scmp.ge.s32.totalorder %s225, 1
                  %s230 = sphi %s189, %s189
                  %s231 = sphi %s185, %s185
                $region50: #{cubic_attention_pallas.2} parent=46 // loop_header_branch
                  %228 = sbr.rel (%p226) target = $region54
                $region51: #{cubic_attention_pallas.2} parent=46 // loop_body
                  %v232 = vld [vmem:[%s230] sm:$0xff]
                  %233 = vst [vmem:[%s231] sm:$0xff] %v232
                  %v234 = vld [vmem:[%s230 + $0x10] sm:$0xff]
                  %235 = vst [vmem:[%s231 + $0x8] sm:$0xff] %v234
                  %v236 = vld [vmem:[%s230 + $0x20] sm:$0xff]
                  %237 = vst [vmem:[%s231 + $0x10] sm:$0xff] %v236
                  %v238 = vld [vmem:[%s230 + $0x30] sm:$0xff]
                  %239 = vst [vmem:[%s231 + $0x18] sm:$0xff] %v238
                  %v240 = vld [vmem:[%s230 + $0x40] sm:$0xff]
                  %241 = vst [vmem:[%s231 + $0x20] sm:$0xff] %v240
                  %v242 = vld [vmem:[%s230 + $0x50] sm:$0xff]
                  %243 = vst [vmem:[%s231 + $0x28] sm:$0xff] %v242
                  %v244 = vld [vmem:[%s230 + $0x60] sm:$0xff]
                  %245 = vst [vmem:[%s231 + $0x30] sm:$0xff] %v244
                  %v246 = vld [vmem:[%s230 + $0x70] sm:$0xff]
                  %247 = vst [vmem:[%s231 + $0x38] sm:$0xff] %v246
                $region52: #{cubic_attention_pallas.2} parent=46 // loop_footer
                  %s229 = sadd.s32 1, %s225
                $region53: #{cubic_attention_pallas.2} parent=46 // loop_footer_branch
                  %224 = sbr.rel target = $region49
                $region54: #{cubic_attention_pallas.2} parent=46 // loop_exit
                  _
              $region47: #{cubic_attention_pallas.2} parent=31 // pred_fallthru
                _
              // Predicated region
              $region55: #{cubic_attention_pallas.2} parent=31 // pred_check
                _
              $region56: #{cubic_attention_pallas.2} parent=31 // pred_check_branch
                %249 = sbr.rel target = $region58
              $region57: #{cubic_attention_pallas.2} parent=31 // pred_region
                _
              $region58: #{cubic_attention_pallas.2} parent=31 // pred_fallthru
                _
            $region32: #{cubic_attention_pallas.2} parent=27 // pred_fallthru
              _
            // Predicated region
            $region33: #{cubic_attention_pallas.2} parent=27 // pred_check
              _
            $region34: #{cubic_attention_pallas.2} parent=27 // pred_check_branch
              %195 = sbr.rel target = $region36
            $region35: #{cubic_attention_pallas.2} parent=27 // pred_region
              %s197 = ssub.s32 256, 1
              loop: start=0, step=1, limit=1
              $region37: #{cubic_attention_pallas.2} parent=35 // loop_pre_header
                _
              $region38: #{cubic_attention_pallas.2} parent=35 // loop_header
                %s199 = sphi 0, %s203
                %p200 = scmp.ge.s32.totalorder %s199, 1
                %s204 = sphi %s189, %s189
                %s205 = sphi %s185, %s185
              $region39: #{cubic_attention_pallas.2} parent=35 // loop_header_branch
                %202 = sbr.rel (%p200) target = $region43
              $region40: #{cubic_attention_pallas.2} parent=35 // loop_body
                %v206 = vld [vmem:[%s204] sm:%s197]
                %207 = vst [vmem:[%s205] sm:%s197] %v206
                %v208 = vld [vmem:[%s204 + $0x10] sm:%s197]
                %209 = vst [vmem:[%s205 + $0x8] sm:%s197] %v208
                %v210 = vld [vmem:[%s204 + $0x20] sm:%s197]
                %211 = vst [vmem:[%s205 + $0x10] sm:%s197] %v210
                %v212 = vld [vmem:[%s204 + $0x30] sm:%s197]
                %213 = vst [vmem:[%s205 + $0x18] sm:%s197] %v212
                %v214 = vld [vmem:[%s204 + $0x40] sm:%s197]
                %215 = vst [vmem:[%s205 + $0x20] sm:%s197] %v214
                %v216 = vld [vmem:[%s204 + $0x50] sm:%s197]
                %217 = vst [vmem:[%s205 + $0x28] sm:%s197] %v216
                %v218 = vld [vmem:[%s204 + $0x60] sm:%s197]
                %219 = vst [vmem:[%s205 + $0x30] sm:%s197] %v218
                %v220 = vld [vmem:[%s204 + $0x70] sm:%s197]
                %221 = vst [vmem:[%s205 + $0x38] sm:%s197] %v220
              $region41: #{cubic_attention_pallas.2} parent=35 // loop_footer
                %s203 = sadd.s32 1, %s199
              $region42: #{cubic_attention_pallas.2} parent=35 // loop_footer_branch
                %198 = sbr.rel target = $region38
              $region43: #{cubic_attention_pallas.2} parent=35 // loop_exit
                _
            $region36: #{cubic_attention_pallas.2} parent=27 // pred_fallthru
              _
          $region28: #{cubic_attention_pallas.2} parent=23 // pred_fallthru
            _
          %250 = vnop
        $region24: #{cubic_attention_pallas.2} parent=19 // pred_fallthru
          _
        // Predicated region
        $region59: #{cubic_attention_pallas.2} parent=19 // pred_check
          %p251 = pneg %p74
        $region60: #{cubic_attention_pallas.2} parent=19 // pred_check_branch
          %253 = sbr.rel (%p251) target = $region62
        $region61: #{cubic_attention_pallas.2} parent=19 // pred_region
          %p254 = scmp.lt.s32.totalorder %s21, 1
          %s255 = scalar_select %p254, %s21, 1
          %s256 = smul.addr %s255, 8
          %s257 = scalar_lea.vmem %s1, %s256
        $region62: #{cubic_attention_pallas.2} parent=19 // pred_fallthru
          _
      $region20: #{cubic_attention_pallas.2} parent=5 // pred_fallthru
        _
      %p258 = scmp.le.s32.totalorder 1, %s14
      %p259 = scmp.lt.s32.totalorder %s14, 5
      %p260 = pnand %p258, %p259
      %p261 = pneg %p260
      // Predicated region
      $region63: #{cubic_attention_pallas.2} parent=5 // pred_check
        _
      $region64: #{cubic_attention_pallas.2} parent=5 // pred_check_branch
        %263 = sbr.rel (%p260) target = $region66
      $region65: #{cubic_attention_pallas.2} parent=5 // pred_region
        %s264 = ssub.s32 %s14, 1
        %s265 = sand.u32 %s41, 1
        %s266 = sand.u32 %s41, 1
        %s267 = smul.addr %s266, 64
        %s268 = scalar_lea.vmem [#allocation2], %s267
        // Predicated region
        $region67: #{cubic_attention_pallas.2} parent=65 // pred_check
          %p269 = pneg %p54
        $region68: #{cubic_attention_pallas.2} parent=65 // pred_check_branch
          %271 = sbr.rel (%p269) target = $region70
        $region69: #{cubic_attention_pallas.2} parent=65 // pred_region
          _
        $region70: #{cubic_attention_pallas.2} parent=65 // pred_fallthru
          _
        %s272 = sand.u32 %s41, 1
        %s273 = sand.u32 %s41, 1
        %s274 = smul.addr %s273, 64
        %s275 = scalar_lea.vmem [#allocation2], %s274
        %p276 = pneg %p54
        %p277 = pneg %p51
        %p278 = scmp.lt.s32.totalorder %s23, 1
        %s279 = scalar_select %p278, %s23, 1
        %s280 = smul.addr %s279, 8
        %s281 = scalar_lea.vmem %s1, %s280
        %p282 = pneg %p80
        %p283 = pneg %p77
        %p284 = pneg %p101
        %p285 = pneg %p98
        %p286 = pneg %p129
        %p287 = pneg %p126
        %s288 = sand.u32 %s116, 1
        %s289 = scalar_lea.sflag [#allocation4], %s288
        %s290 = sand.u32 %s116, 1
        %s291 = smul.addr %s290, 64
        %s292 = scalar_lea.vmem [#allocation3], %s291
        %p293 = pneg %p157
        %p294 = pneg %p154
        %p295 = scmp.lt.s32.totalorder %s23, 1
        %s296 = scalar_select %p295, %s23, 1
        %p297 = scmp.lt.s32.totalorder %s24, 1
        %s298 = scalar_select %p297, %s24, 1
        %s299 = smul.addr %s296, 2
        %s300 = sadd.s32 %s298, %s299
        %s301 = scalar_lea.vmem %s4, %s300
        %p302 = scmp.lt.s32.totalorder %s23, 1
        %s303 = scalar_select %p302, %s23, 1
        %s304 = smul.addr %s303, 8
        %s305 = scalar_lea.vmem %s1, %s304
        %p306 = scmp.lt.s32.totalorder %s23, 1
        %s307 = scalar_select %p306, %s23, 1
        %p308 = scmp.lt.s32.totalorder %s24, 1
        %s309 = scalar_select %p308, %s24, 1
        %s310 = smul.addr %s307, 2
        %s311 = sadd.s32 %s309, %s310
        %s312 = scalar_lea.vmem %s4, %s311
        %v313 = vld [vmem:[%s268] sm:$0xff]
        %v314 = vld [vmem:[%s268 + $0x8] sm:$0xff]
        %v315 = vld [vmem:[%s268 + $0x10] sm:$0xff]
        %v316 = vld [vmem:[%s268 + $0x18] sm:$0xff]
        %v317 = vld [vmem:[%s268 + $0x20] sm:$0xff]
        %v318 = vld [vmem:[%s268 + $0x28] sm:$0xff]
        %v319 = vld [vmem:[%s268 + $0x30] sm:$0xff]
        %v320 = vld [vmem:[%s268 + $0x38] sm:$0xff]
        %v321 = vld [vmem:[%s305] sm:$0xff]
        %v322 = vld [vmem:[%s2] sm:$0xff]
        %vm323 = vcmask 195584
        %v324 = vsel %vm323, %v313, 0.0
        %325 = vadd.xlane.f32.xlu0 %v324
        %v326 = vpop.xlane.xlu0 %325
        %v327 = vsel %vm323, %v314, 0.0
        %328 = vadd.xlane.f32.xlu0 %v327
        %v329 = vpop.xlane.xlu0 %328
        %v330 = vsel %vm323, %v315, 0.0
        %331 = vadd.xlane.f32.xlu0 %v330
        %v332 = vpop.xlane.xlu0 %331
        %v333 = vsel %vm323, %v316, 0.0
        %334 = vadd.xlane.f32.xlu0 %v333
        %v335 = vpop.xlane.xlu0 %334
        %v336 = vsel %vm323, %v317, 0.0
        %337 = vadd.xlane.f32.xlu0 %v336
        %v338 = vpop.xlane.xlu0 %337
        %v339 = vsel %vm323, %v318, 0.0
        %340 = vadd.xlane.f32.xlu0 %v339
        %v341 = vpop.xlane.xlu0 %340
        %v342 = vsel %vm323, %v319, 0.0
        %343 = vadd.xlane.f32.xlu0 %v342
        %v344 = vpop.xlane.xlu0 %343
        %v345 = vsel %vm323, %v320, 0.0
        %346 = vadd.xlane.f32.xlu0 %v345
        %v347 = vpop.xlane.xlu0 %346
        %v349 = vrot.slane %v321, 1
        %v350 = vrot.slane %v321, 2
        %v351 = vrot.slane %v321, 3
        %v352 = vrot.slane %v321, 4
        %v353 = vrot.slane %v321, 5
        %v354 = vrot.slane %v321, 6
        %v355 = vrot.slane %v321, 7
        %364 = vrot.lane.b32.xlu0 %v313, 127
        %v365 = vpop.permute.xlu0 %364
        %366 = vrot.lane.b32.xlu0 %v314, 127
        %v367 = vpop.permute.xlu0 %366
        %368 = vrot.lane.b32.xlu0 %v315, 127
        %v369 = vpop.permute.xlu0 %368
        %370 = vrot.lane.b32.xlu0 %v316, 127
        %v371 = vpop.permute.xlu0 %370
        %372 = vrot.lane.b32.xlu0 %v317, 127
        %v373 = vpop.permute.xlu0 %372
        %374 = vrot.lane.b32.xlu0 %v318, 127
        %v375 = vpop.permute.xlu0 %374
        %376 = vrot.lane.b32.xlu0 %v319, 127
        %v377 = vpop.permute.xlu0 %376
        %378 = vrot.lane.b32.xlu0 %v320, 127
        %v379 = vpop.permute.xlu0 %378
        %388 = vrot.lane.b32.xlu0 %v313, 1
        %v389 = vpop.permute.xlu0 %388
        %390 = vrot.lane.b32.xlu0 %v314, 1
        %v391 = vpop.permute.xlu0 %390
        %392 = vrot.lane.b32.xlu0 %v315, 1
        %v393 = vpop.permute.xlu0 %392
        %394 = vrot.lane.b32.xlu0 %v316, 1
        %v395 = vpop.permute.xlu0 %394
        %396 = vrot.lane.b32.xlu0 %v317, 1
        %v397 = vpop.permute.xlu0 %396
        %398 = vrot.lane.b32.xlu0 %v318, 1
        %v399 = vpop.permute.xlu0 %398
        %400 = vrot.lane.b32.xlu0 %v319, 1
        %v401 = vpop.permute.xlu0 %400
        %402 = vrot.lane.b32.xlu0 %v320, 1
        %v403 = vpop.permute.xlu0 %402
        %vm412 = vcmask 7168
        %v413 = vsel %vm412, %v365, %v389
        %v414 = vsel %vm412, %v367, %v391
        %v415 = vsel %vm412, %v369, %v393
        %v416 = vsel %vm412, %v371, %v395
        %v417 = vsel %vm412, %v373, %v397
        %v418 = vsel %vm412, %v375, %v399
        %v419 = vsel %vm412, %v377, %v401
        %v420 = vsel %vm412, %v379, %v403
        %v421 = vperm.slane %v321, 0
        %v422 = vperm.slane %v349, 0
        %v423 = vperm.slane %v350, 0
        %v424 = vperm.slane %v351, 0
        %v425 = vperm.slane %v352, 0
        %v426 = vperm.slane %v353, 0
        %v427 = vperm.slane %v354, 0
        %v428 = vperm.slane %v355, 0
        %429 = vset.pattern.permute.xlu0 0
        %430 = vperm.xlu0 %429, %v421
        %v431 = vpop.permute.xlu0 %430
        %433 = vset.pattern.permute.xlu0 0
        %434 = vperm.xlu0 %433, %v422
        %v435 = vpop.permute.xlu0 %434
        %437 = vset.pattern.permute.xlu0 0
        %438 = vperm.xlu0 %437, %v423
        %v439 = vpop.permute.xlu0 %438
        %441 = vset.pattern.permute.xlu0 0
        %442 = vperm.xlu0 %441, %v424
        %v443 = vpop.permute.xlu0 %442
        %445 = vset.pattern.permute.xlu0 0
        %446 = vperm.xlu0 %445, %v425
        %v447 = vpop.permute.xlu0 %446
        %449 = vset.pattern.permute.xlu0 0
        %450 = vperm.xlu0 %449, %v426
        %v451 = vpop.permute.xlu0 %450
        %453 = vset.pattern.permute.xlu0 0
        %454 = vperm.xlu0 %453, %v427
        %v455 = vpop.permute.xlu0 %454
        %457 = vset.pattern.permute.xlu0 0
        %458 = vperm.xlu0 %457, %v428
        %v459 = vpop.permute.xlu0 %458
        %v461 = vmul.f32 %v431, %v413
        %v462 = vmul.f32 %v435, %v414
        %v463 = vmul.f32 %v439, %v415
        %v464 = vmul.f32 %v443, %v416
        %v465 = vmul.f32 %v447, %v417
        %v466 = vmul.f32 %v451, %v418
        %v467 = vmul.f32 %v455, %v419
        %v468 = vmul.f32 %v459, %v420
        %469 = vset.pattern.permute.xlu0 1
        %470 = vperm.xlu0 %469, %v421
        %v471 = vpop.permute.xlu0 %470
        %473 = vset.pattern.permute.xlu0 1
        %474 = vperm.xlu0 %473, %v422
        %v475 = vpop.permute.xlu0 %474
        %477 = vset.pattern.permute.xlu0 1
        %478 = vperm.xlu0 %477, %v423
        %v479 = vpop.permute.xlu0 %478
        %481 = vset.pattern.permute.xlu0 1
        %482 = vperm.xlu0 %481, %v424
        %v483 = vpop.permute.xlu0 %482
        %485 = vset.pattern.permute.xlu0 1
        %486 = vperm.xlu0 %485, %v425
        %v487 = vpop.permute.xlu0 %486
        %489 = vset.pattern.permute.xlu0 1
        %490 = vperm.xlu0 %489, %v426
        %v491 = vpop.permute.xlu0 %490
        %493 = vset.pattern.permute.xlu0 1
        %494 = vperm.xlu0 %493, %v427
        %v495 = vpop.permute.xlu0 %494
        %497 = vset.pattern.permute.xlu0 1
        %498 = vperm.xlu0 %497, %v428
        %v499 = vpop.permute.xlu0 %498
        %v501 = vmul.f32 %v471, %v313
        %v502 = vmul.f32 %v475, %v314
        %v503 = vmul.f32 %v479, %v315
        %v504 = vmul.f32 %v483, %v316
        %v505 = vmul.f32 %v487, %v317
        %v506 = vmul.f32 %v491, %v318
        %v507 = vmul.f32 %v495, %v319
        %v508 = vmul.f32 %v499, %v320
        %v509 = vadd.f32 %v461, %v501
        %v510 = vadd.f32 %v462, %v502
        %v511 = vadd.f32 %v463, %v503
        %v512 = vadd.f32 %v464, %v504
        %v513 = vadd.f32 %v465, %v505
        %v514 = vadd.f32 %v466, %v506
        %v515 = vadd.f32 %v467, %v507
        %v516 = vadd.f32 %v468, %v508
        %vm517 = vcmask 187392
        %v518 = vsel %vm517, %v365, %v389
        %v519 = vsel %vm517, %v367, %v391
        %v520 = vsel %vm517, %v369, %v393
        %v521 = vsel %vm517, %v371, %v395
        %v522 = vsel %vm517, %v373, %v397
        %v523 = vsel %vm517, %v375, %v399
        %v524 = vsel %vm517, %v377, %v401
        %v525 = vsel %vm517, %v379, %v403
        %526 = vset.pattern.permute.xlu0 2
        %527 = vperm.xlu0 %526, %v421
        %v528 = vpop.permute.xlu0 %527
        %530 = vset.pattern.permute.xlu0 2
        %531 = vperm.xlu0 %530, %v422
        %v532 = vpop.permute.xlu0 %531
        %534 = vset.pattern.permute.xlu0 2
        %535 = vperm.xlu0 %534, %v423
        %v536 = vpop.permute.xlu0 %535
        %538 = vset.pattern.permute.xlu0 2
        %539 = vperm.xlu0 %538, %v424
        %v540 = vpop.permute.xlu0 %539
        %542 = vset.pattern.permute.xlu0 2
        %543 = vperm.xlu0 %542, %v425
        %v544 = vpop.permute.xlu0 %543
        %546 = vset.pattern.permute.xlu0 2
        %547 = vperm.xlu0 %546, %v426
        %v548 = vpop.permute.xlu0 %547
        %550 = vset.pattern.permute.xlu0 2
        %551 = vperm.xlu0 %550, %v427
        %v552 = vpop.permute.xlu0 %551
        %554 = vset.pattern.permute.xlu0 2
        %555 = vperm.xlu0 %554, %v428
        %v556 = vpop.permute.xlu0 %555
        %v558 = vmul.f32 %v528, %v518
        %v559 = vmul.f32 %v532, %v519
        %v560 = vmul.f32 %v536, %v520
        %v561 = vmul.f32 %v540, %v521
        %v562 = vmul.f32 %v544, %v522
        %v563 = vmul.f32 %v548, %v523
        %v564 = vmul.f32 %v552, %v524
        %v565 = vmul.f32 %v556, %v525
        %v566 = vadd.f32 %v509, %v558
        %v567 = vadd.f32 %v510, %v559
        %v568 = vadd.f32 %v511, %v560
        %v569 = vadd.f32 %v512, %v561
        %v570 = vadd.f32 %v513, %v562
        %v571 = vadd.f32 %v514, %v563
        %v572 = vadd.f32 %v515, %v564
        %v573 = vadd.f32 %v516, %v565
        %v575 = vrot.slane %v322, 1
        %v576 = vrot.slane %v322, 2
        %v577 = vrot.slane %v322, 3
        %v578 = vrot.slane %v322, 4
        %v579 = vrot.slane %v322, 5
        %v580 = vrot.slane %v322, 6
        %v581 = vrot.slane %v322, 7
        %v582 = vperm.slane %v322, 0
        %v583 = vperm.slane %v575, 0
        %v584 = vperm.slane %v576, 0
        %v585 = vperm.slane %v577, 0
        %v586 = vperm.slane %v578, 0
        %v587 = vperm.slane %v579, 0
        %v588 = vperm.slane %v580, 0
        %v589 = vperm.slane %v581, 0
        %v598 = vmul.f32 %v582, %v326
        %v599 = vmul.f32 %v583, %v329
        %v600 = vmul.f32 %v584, %v332
        %v601 = vmul.f32 %v585, %v335
        %v602 = vmul.f32 %v586, %v338
        %v603 = vmul.f32 %v587, %v341
        %v604 = vmul.f32 %v588, %v344
        %v605 = vmul.f32 %v589, %v347
        %607 = vset.pattern.permute.xlu0 0
        %608 = vperm.xlu0 %607, %v598
        %v609 = vpop.permute.xlu0 %608
        %612 = vset.pattern.permute.xlu0 0
        %613 = vperm.xlu0 %612, %v599
        %v614 = vpop.permute.xlu0 %613
        %617 = vset.pattern.permute.xlu0 0
        %618 = vperm.xlu0 %617, %v600
        %v619 = vpop.permute.xlu0 %618
        %622 = vset.pattern.permute.xlu0 0
        %623 = vperm.xlu0 %622, %v601
        %v624 = vpop.permute.xlu0 %623
        %627 = vset.pattern.permute.xlu0 0
        %628 = vperm.xlu0 %627, %v602
        %v629 = vpop.permute.xlu0 %628
        %632 = vset.pattern.permute.xlu0 0
        %633 = vperm.xlu0 %632, %v603
        %v634 = vpop.permute.xlu0 %633
        %637 = vset.pattern.permute.xlu0 0
        %638 = vperm.xlu0 %637, %v604
        %v639 = vpop.permute.xlu0 %638
        %642 = vset.pattern.permute.xlu0 0
        %643 = vperm.xlu0 %642, %v605
        %v644 = vpop.permute.xlu0 %643
        %v646 = vsub.f32 %v566, %v609
        %v647 = vsub.f32 %v567, %v614
        %v648 = vsub.f32 %v568, %v619
        %v649 = vsub.f32 %v569, %v624
        %v650 = vsub.f32 %v570, %v629
        %v651 = vsub.f32 %v571, %v634
        %v652 = vsub.f32 %v572, %v639
        %v653 = vsub.f32 %v573, %v644
        %654 = vset.pattern.permute.xlu0 1
        %655 = vperm.xlu0 %654, %v582
        %v656 = vpop.permute.xlu0 %655
        %658 = vset.pattern.permute.xlu0 1
        %659 = vperm.xlu0 %658, %v583
        %v660 = vpop.permute.xlu0 %659
        %662 = vset.pattern.permute.xlu0 1
        %663 = vperm.xlu0 %662, %v584
        %v664 = vpop.permute.xlu0 %663
        %666 = vset.pattern.permute.xlu0 1
        %667 = vperm.xlu0 %666, %v585
        %v668 = vpop.permute.xlu0 %667
        %670 = vset.pattern.permute.xlu0 1
        %671 = vperm.xlu0 %670, %v586
        %v672 = vpop.permute.xlu0 %671
        %674 = vset.pattern.permute.xlu0 1
        %675 = vperm.xlu0 %674, %v587
        %v676 = vpop.permute.xlu0 %675
        %678 = vset.pattern.permute.xlu0 1
        %679 = vperm.xlu0 %678, %v588
        %v680 = vpop.permute.xlu0 %679
        %682 = vset.pattern.permute.xlu0 1
        %683 = vperm.xlu0 %682, %v589
        %v684 = vpop.permute.xlu0 %683
        %v686 = vmul.f32 %v656, %v313
        %v687 = vmul.f32 %v660, %v314
        %v688 = vmul.f32 %v664, %v315
        %v689 = vmul.f32 %v668, %v316
        %v690 = vmul.f32 %v672, %v317
        %v691 = vmul.f32 %v676, %v318
        %v692 = vmul.f32 %v680, %v319
        %v693 = vmul.f32 %v684, %v320
        %v694 = vadd.f32 %v646, %v686
        %v695 = vadd.f32 %v647, %v687
        %v696 = vadd.f32 %v648, %v688
        %v697 = vadd.f32 %v649, %v689
        %v698 = vadd.f32 %v650, %v690
        %v699 = vadd.f32 %v651, %v691
        %v700 = vadd.f32 %v652, %v692
        %v701 = vadd.f32 %v653, %v693
        %702 = vst.msk [vmem:[%s292] sm:$0xff] %vm323, %v694
        %703 = vst.msk [vmem:[%s292 + $0x8] sm:$0xff] %vm323, %v695
        %704 = vst.msk [vmem:[%s292 + $0x10] sm:$0xff] %vm323, %v696
        %705 = vst.msk [vmem:[%s292 + $0x18] sm:$0xff] %vm323, %v697
        %706 = vst.msk [vmem:[%s292 + $0x20] sm:$0xff] %vm323, %v698
        %707 = vst.msk [vmem:[%s292 + $0x28] sm:$0xff] %vm323, %v699
        %708 = vst.msk [vmem:[%s292 + $0x30] sm:$0xff] %vm323, %v700
        %709 = vst.msk [vmem:[%s292 + $0x38] sm:$0xff] %vm323, %v701
        %v710 = vsel %vm323, %v694, 0.0
        %711 = vadd.xlane.f32.xlu0 %v710
        %v712 = vpop.xlane.xlu0 %711
        %v713 = vsel %vm323, %v695, 0.0
        %714 = vadd.xlane.f32.xlu0 %v713
        %v715 = vpop.xlane.xlu0 %714
        %v716 = vsel %vm323, %v696, 0.0
        %717 = vadd.xlane.f32.xlu0 %v716
        %v718 = vpop.xlane.xlu0 %717
        %v719 = vsel %vm323, %v697, 0.0
        %720 = vadd.xlane.f32.xlu0 %v719
        %v721 = vpop.xlane.xlu0 %720
        %v722 = vsel %vm323, %v698, 0.0
        %723 = vadd.xlane.f32.xlu0 %v722
        %v724 = vpop.xlane.xlu0 %723
        %v725 = vsel %vm323, %v699, 0.0
        %726 = vadd.xlane.f32.xlu0 %v725
        %v727 = vpop.xlane.xlu0 %726
        %v728 = vsel %vm323, %v700, 0.0
        %729 = vadd.xlane.f32.xlu0 %v728
        %v730 = vpop.xlane.xlu0 %729
        %v731 = vsel %vm323, %v701, 0.0
        %732 = vadd.xlane.f32.xlu0 %v731
        %v733 = vpop.xlane.xlu0 %732
        %v742 = vlaneseq
        %v743 = vand.u32 %v742, 127
        %v744 = vperm.slane %v712, %v743
        %v745 = vperm.slane %v715, %v743
        %v746 = vperm.slane %v718, %v743
        %v747 = vperm.slane %v721, %v743
        %v748 = vperm.slane %v724, %v743
        %v749 = vperm.slane %v727, %v743
        %v750 = vperm.slane %v730, %v743
        %v751 = vperm.slane %v733, %v743
        %vm752 = vcmask 1041409
        %v753 = vsel %vm752, %v745, %v744
        %vm754 = vcmask 1042434
        %v755 = vsel %vm754, %v746, %v753
        %vm756 = vcmask 1043459
        %v757 = vsel %vm756, %v747, %v755
        %vm758 = vcmask 1044484
        %v759 = vsel %vm758, %v748, %v757
        %vm760 = vcmask 1045509
        %v761 = vsel %vm760, %v749, %v759
        %vm762 = vcmask 1046534
        %v763 = vsel %vm762, %v750, %v761
        %vm764 = vcmask 1047559
        %v765 = vsel %vm764, %v751, %v763
        %vm767 = vcmask 64512
        %v768 = vsel %vm767, %v765, 0.0
        %769 = vadd.xlane.f32.xlu0 %v768
        %v770 = vpop.xlane.xlu0 %769
        %v772 = vperm.slane %v770, %v743
        %vm774 = vcmask 57344
        %775 = vst.msk [vmem:[%s312] sm:$0x1] %vm774, %v772
        %s776 = sand.u32 %s116, 1
        %s777 = scalar_lea.sflag [#allocation4], %s776
        %s778 = sand.u32 %s116, 1
        %s779 = smul.addr %s778, 64
        %s780 = scalar_lea.vmem [#allocation3], %s779
        %p781 = scmp.lt.s32.totalorder %s23, 1
        %s782 = scalar_select %p781, %s23, 1
        %p783 = scmp.lt.s32.totalorder %s24, 1
        %s784 = scalar_select %p783, %s24, 1
        %s785 = smul.addr %s782, 2
        %s786 = sadd.s32 %s784, %s785
        %s787 = scalar_lea.vmem %s4, %s786
        // Predicated region
        $region71: #{cubic_attention_pallas.2} parent=65 // pred_check
          %p788 = pneg %p126
        $region72: #{cubic_attention_pallas.2} parent=65 // pred_check_branch
          %790 = sbr.rel (%p788) target = $region74
        $region73: #{cubic_attention_pallas.2} parent=65 // pred_region
          %792 = vsyncadd %s777, 0
          %s793 = smul.addr %s23, 16
          %s794 = sadd.s32 %s24, %s793
          %s795 = smul.addr %s794, 8
          %s796 = scalar_lea.hbm %s3, %s795
          %s797 = sshll.u32 %s780, 4
          %s798 = int_to_ptr.vmem [resolvable:$true] %s797
          %s799 = sshll.u32 %s796, 4
          %s800 = int_to_ptr.hbm [resolvable:$true] %s799
          %805 = dma.vmem_to_hbm [thread:$0]  %s798, 1024, %s800, %s777, 128, 256, 8
        $region74: #{cubic_attention_pallas.2} parent=65 // pred_fallthru
          _
        // Predicated region
        $region75: #{cubic_attention_pallas.2} parent=65 // pred_check
          %p806 = pneg %p154
        $region76: #{cubic_attention_pallas.2} parent=65 // pred_check_branch
          %808 = sbr.rel (%p806) target = $region78
        $region77: #{cubic_attention_pallas.2} parent=65 // pred_region
          _
        $region78: #{cubic_attention_pallas.2} parent=65 // pred_fallthru
          _
      $region66: #{cubic_attention_pallas.2} parent=5 // pred_fallthru
        _
      %p809 = scmp.le.s32.totalorder 2, %s14
      // Predicated region
      $region79: #{cubic_attention_pallas.2} parent=5 // pred_check
        %p810 = pneg %p809
      $region80: #{cubic_attention_pallas.2} parent=5 // pred_check_branch
        %812 = sbr.rel (%p810) target = $region82
      $region81: #{cubic_attention_pallas.2} parent=5 // pred_region
        %s813 = ssub.s32 %s14, 2
        // Predicated region
        $region83: #{cubic_attention_pallas.2} parent=81 // pred_check
          %p814 = pneg %p132
        $region84: #{cubic_attention_pallas.2} parent=81 // pred_check_branch
          %816 = sbr.rel (%p814) target = $region86
        $region85: #{cubic_attention_pallas.2} parent=81 // pred_region
          %s817 = sand.u32 %s117, 1
          %s818 = scalar_lea.sflag [#allocation4], %s817
          %s819 = sand.u32 %s117, 1
          %s820 = smul.addr %s819, 64
          %s821 = scalar_lea.vmem [#allocation3], %s820
          %823 = dma.done %s818, 1024
        $region86: #{cubic_attention_pallas.2} parent=81 // pred_fallthru
          _
        // Predicated region
        $region87: #{cubic_attention_pallas.2} parent=81 // pred_check
          %p824 = pneg %p160
        $region88: #{cubic_attention_pallas.2} parent=81 // pred_check_branch
          %826 = sbr.rel (%p824) target = $region90
        $region89: #{cubic_attention_pallas.2} parent=81 // pred_region
          %p827 = scmp.lt.s32.totalorder %s25, 1
          %s828 = scalar_select %p827, %s25, 1
          %p829 = scmp.lt.s32.totalorder %s26, 1
          %s830 = scalar_select %p829, %s26, 1
          %s831 = smul.addr %s828, 2
          %s832 = sadd.s32 %s830, %s831
          %s833 = scalar_lea.vmem %s4, %s832
        $region90: #{cubic_attention_pallas.2} parent=81 // pred_fallthru
          _
      $region82: #{cubic_attention_pallas.2} parent=5 // pred_fallthru
        _
    $region6: #{cubic_attention_pallas.2} parent=1 // loop_footer
      %s18 = sadd.s32 1, %s14
    $region7: #{cubic_attention_pallas.2} parent=1 // loop_footer_branch
      %13 = sbr.rel target = $region3
    $region8: #{cubic_attention_pallas.2} parent=1 // loop_exit
      _
    %834 = vsyncpa [#allocation4], 1
    %s835 = scalar_lea.sflag [#allocation4], 1
    %836 = vsyncpa %s835, 1

// kernel: cubic_attention_pallas.3
$region0: #{cubic_attention_pallas.3}
  #allocation0 [shape = 'u32[]', space=smem, size = 0x4, offset = 0x4, fixed_abs, tag = 'smem constant byte address 0x4 - core index']
  #allocation1 [shape = 'u32[72,128]{1,0:T(1,128)}', space=vmem, size = 0x9000, scoped, tag = 'internal scratch']
  %s0 = inlined_call_operand.hbm [shape: f32[2,8,16,24], index: 0, kind: input, shape index: {}, may-alias: {0,4}]
  %s1 = inlined_call_operand.vmem [shape: f32[2,8,16,24], index: 1, kind: input, shape index: {}]
  %s2 = inlined_call_operand.vmem [shape: f32[2,8,3], index: 2, kind: input, shape index: {}]
  %s3 = inlined_call_operand.vmem [shape: f32[8,3], index: 3, kind: input, shape index: {}]
  %s4 = inlined_call_operand.hbm [shape: f32[2,8,16,24], index: 4, kind: output, shape index: {}, may-alias: {0,4}]
  %s5 = sld [smem:[#allocation0]]
  $region53: #{cubic_attention_pallas.3} parent=0
    _
  %s7 = ssub.s32 1, %s5
  %s8 = scalar_select 0, %s7, %s5
  $region1: #{cubic_attention_pallas.3} parent=0
    #allocation2 [shape = 'u8[131072]{0}', space=vmem, size = 0x20000, scoped, tag = 'input window, operand 0']
    #allocation3 [shape = 's32[2]{0}', space=sflag, size = 0x8, scoped, tag = 'scoped memory for cubic_attention_pallas.3']
    #allocation4 [shape = 's32[2]{0}', space=sflag, size = 0x8, scoped, tag = 'scoped memory for cubic_attention_pallas.3']
    #allocation5 [shape = 'u8[131072]{0}', space=vmem, size = 0x20000, scoped, tag = 'output window, operand 0']
    %9 = vsyncpa [#allocation3], 0
    %s10 = scalar_lea.sflag [#allocation3], 1
    %11 = vsyncpa %s10, 0
    %12 = vsyncpa [#allocation4], 0
    %s13 = scalar_lea.sflag [#allocation4], 1
    %14 = vsyncpa %s13, 0
    loop: start=0, step=1, limit=4
    $region2: #{cubic_attention_pallas.3} parent=1 // loop_pre_header
      _
    $region3: #{cubic_attention_pallas.3} parent=1 // loop_header
      %s16 = sphi 0, %s20
      %p17 = scmp.ge.s32.totalorder %s16, 4
      %s23 = sphi 0, %s35
      %s24 = sphi 0, %s31
      %s25 = sphi 0, %s23
      %s26 = sphi 0, %s24
      %s27 = sphi 0, %s25
      %s28 = sphi 0, %s26
      %s40 = sphi 0, %s42
      %s43 = sphi 0, %s40
      %s44 = sphi 0, %s43
      %s60 = sphi 0, %s44
      %s68 = sphi 0, %s70
      %s71 = sphi 0, %s68
      %s72 = sphi 0, %s71
      %s88 = sphi 0, %s72
      %s94 = sphi 0, %s96
      %s97 = sphi 0, %s94
      %s98 = sphi 0, %s97
      %s114 = sphi 0, %s98
      %s118 = sphi 0, %s118
      %s120 = sphi 0, %s118
      %s121 = sphi 0, %s120
      %s135 = sphi 0, %s121
      %s143 = sphi 0, %s145
      %s146 = sphi 0, %s143
      %s147 = sphi 0, %s146
      %s163 = sphi 0, %s147
    $region4: #{cubic_attention_pallas.3} parent=1 // loop_header_branch
      %19 = sbr.rel (%p17) target = $region8
    $region5: #{cubic_attention_pallas.3} parent=1 // loop_body
      %s21 = ssub.s32 %s16, 1
      %s22 = ssub.s32 %s16, 2
      %s29 = sadd.s32 1, %s24
      %p30 = scmp.ge.s32.totalorder %s29, 1
      %s31 = scalar_select %p30, 0, %s29
      %s32 = sadd.s32 1, %s23
      %s33 = scalar_select %p30, %s32, %s23
      %p34 = scmp.ge.s32.totalorder %s33, 2
      %s35 = scalar_select %p34, 0, %s33
      %s36 = ssub.s32 %s23, %s35
      %s37 = ssub.s32 %s24, %s31
      %s38 = sor.u32 %s36, %s37
      %p39 = scmp.eq.s32.totalorder %s38, 0
      %s41 = sadd.s32 %s40, 1
      %s42 = scalar_select %p39, %s40, %s41
      %p45 = pneg %p39
      %p46 = scmp.eq.s32.totalorder %s16, 1
      %p47 = por %p45, %p46
      %p48 = scmp.ne.s32.totalorder %s40, %s43
      %p49 = scmp.eq.s32.totalorder %s16, 0
      %p50 = por %p48, %p49
      %p51 = scmp.ne.s32.totalorder %s40, %s43
      %p52 = scmp.eq.s32.totalorder %s21, 1
      %p53 = por %p51, %p52
      %p54 = scmp.ne.s32.totalorder %s43, %s44
      %p55 = scmp.eq.s32.totalorder %s21, 0
      %p56 = por %p54, %p55
      %p57 = scmp.ne.s32.totalorder %s43, %s44
      %p58 = scmp.eq.s32.totalorder %s22, 1
      %p59 = por %p57, %p58
      %p61 = scmp.ne.s32.totalorder %s44, %s60
      %p62 = scmp.eq.s32.totalorder %s22, 0
      %p63 = por %p61, %p62
      %s64 = ssub.s32 %s23, %s35
      %s65 = ssub.s32 %s24, %s31
      %s66 = sor.u32 %s64, %s65
      %p67 = scmp.eq.s32.totalorder %s66, 0
      %s69 = sadd.s32 %s68, 1
      %s70 = scalar_select %p67, %s68, %s69
      %p73 = pneg %p67
      %p74 = scmp.eq.s32.totalorder %s16, 1
      %p75 = por %p73, %p74
      %p76 = scmp.ne.s32.totalorder %s68, %s71
      %p77 = scmp.eq.s32.totalorder %s16, 0
      %p78 = por %p76, %p77
      %p79 = scmp.ne.s32.totalorder %s68, %s71
      %p80 = scmp.eq.s32.totalorder %s21, 1
      %p81 = por %p79, %p80
      %p82 = scmp.ne.s32.totalorder %s71, %s72
      %p83 = scmp.eq.s32.totalorder %s21, 0
      %p84 = por %p82, %p83
      %p85 = scmp.ne.s32.totalorder %s71, %s72
      %p86 = scmp.eq.s32.totalorder %s22, 1
      %p87 = por %p85, %p86
      %p89 = scmp.ne.s32.totalorder %s72, %s88
      %p90 = scmp.eq.s32.totalorder %s22, 0
      %p91 = por %p89, %p90
      %s92 = ssub.s32 %s23, %s35
      %p93 = scmp.eq.s32.totalorder %s92, 0
      %s95 = sadd.s32 %s94, 1
      %s96 = scalar_select %p93, %s94, %s95
      %p99 = pneg %p93
      %p100 = scmp.eq.s32.totalorder %s16, 1
      %p101 = por %p99, %p100
      %p102 = scmp.ne.s32.totalorder %s94, %s97
      %p103 = scmp.eq.s32.totalorder %s16, 0
      %p104 = por %p102, %p103
      %p105 = scmp.ne.s32.totalorder %s94, %s97
      %p106 = scmp.eq.s32.totalorder %s21, 1
      %p107 = por %p105, %p106
      %p108 = scmp.ne.s32.totalorder %s97, %s98
      %p109 = scmp.eq.s32.totalorder %s21, 0
      %p110 = por %p108, %p109
      %p111 = scmp.ne.s32.totalorder %s97, %s98
      %p112 = scmp.eq.s32.totalorder %s22, 1
      %p113 = por %p111, %p112
      %p115 = scmp.ne.s32.totalorder %s98, %s114
      %p116 = scmp.eq.s32.totalorder %s22, 0
      %p117 = por %p115, %p116
      %s119 = sadd.s32 %s118, 1
      %p122 = scmp.eq.s32.totalorder %s16, 1
      %p123 = scmp.ne.s32.totalorder %s118, %s120
      %p124 = scmp.eq.s32.totalorder %s16, 0
      %p125 = por %p123, %p124
      %p126 = scmp.ne.s32.totalorder %s118, %s120
      %p127 = scmp.eq.s32.totalorder %s21, 1
      %p128 = por %p126, %p127
      %p129 = scmp.ne.s32.totalorder %s120, %s121
      %p130 = scmp.eq.s32.totalorder %s21, 0
      %p131 = por %p129, %p130
      %p132 = scmp.ne.s32.totalorder %s120, %s121
      %p133 = scmp.eq.s32.totalorder %s22, 1
      %p134 = por %p132, %p133
      %p136 = scmp.ne.s32.totalorder %s121, %s135
      %p137 = scmp.eq.s32.totalorder %s22, 0
      %p138 = por %p136, %p137
      %s139 = ssub.s32 %s23, %s35
      %s140 = ssub.s32 %s24, %s31
      %s141 = sor.u32 %s139, %s140
      %p142 = scmp.eq.s32.totalorder %s141, 0
      %s144 = sadd.s32 %s143, 1
      %s145 = scalar_select %p142, %s143, %s144
      %p148 = pneg %p142
      %p149 = scmp.eq.s32.totalorder %s16, 1
      %p150 = por %p148, %p149
      %p151 = scmp.ne.s32.totalorder %s143, %s146
      %p152 = scmp.eq.s32.totalorder %s16, 0
      %p153 = por %p151, %p152
      %p154 = scmp.ne.s32.totalorder %s143, %s146
      %p155 = scmp.eq.s32.totalorder %s21, 1
      %p156 = por %p154, %p155
      %p157 = scmp.ne.s32.totalorder %s146, %s147
      %p158 = scmp.eq.s32.totalorder %s21, 0
      %p159 = por %p157, %p158
      %p160 = scmp.ne.s32.totalorder %s146, %s147
      %p161 = scmp.eq.s32.totalorder %s22, 1
      %p162 = por %p160, %p161
      %p164 = scmp.ne.s32.totalorder %s147, %s163
      %p165 = scmp.eq.s32.totalorder %s22, 0
      %p166 = por %p164, %p165
      %p167 = scmp.le.s32.totalorder 1, %s16
      %p168 = scmp.lt.s32.totalorder %s16, 3
      %p169 = pnand %p167, %p168
      %p170 = pneg %p169
      // Predicated region
      $region9: #{cubic_attention_pallas.3} parent=5 // pred_check
        _
      $region10: #{cubic_attention_pallas.3} parent=5 // pred_check_branch
        %172 = sbr.rel (%p169) target = $region12
      $region11: #{cubic_attention_pallas.3} parent=5 // pred_region
        %s173 = ssub.s32 %s16, 1
        // Predicated region
        $region13: #{cubic_attention_pallas.3} parent=11 // pred_check
          %p174 = pneg %p131
        $region14: #{cubic_attention_pallas.3} parent=11 // pred_check_branch
          %176 = sbr.rel (%p174) target = $region16
        $region15: #{cubic_attention_pallas.3} parent=11 // pred_region
          _
        $region16: #{cubic_attention_pallas.3} parent=11 // pred_fallthru
          _
      $region12: #{cubic_attention_pallas.3} parent=5 // pred_fallthru
        _
      %p177 = scmp.lt.s32.totalorder %s16, 2
      // Predicated region
      $region17: #{cubic_attention_pallas.3} parent=5 // pred_check
        %p178 = pneg %p177
      $region18: #{cubic_attention_pallas.3} parent=5 // pred_check_branch
        %180 = sbr.rel (%p178) target = $region20
      $region19: #{cubic_attention_pallas.3} parent=5 // pred_region
        // Predicated region
        $region21: #{cubic_attention_pallas.3} parent=19 // pred_check
          %p181 = pneg %p50
        $region22: #{cubic_attention_pallas.3} parent=19 // pred_check_branch
          %183 = sbr.rel (%p181) target = $region24
        $region23: #{cubic_attention_pallas.3} parent=19 // pred_region
          %s184 = sand.u32 %s40, 1
          %s185 = scalar_lea.sflag [#allocation3], %s184
          %s186 = sand.u32 %s40, 1
          %s187 = smul.addr %s186, 128
          %s188 = scalar_lea.vmem [#allocation2], %s187
          %190 = vsyncadd %s185, 0
          %s191 = smul.addr %s23, 16
          %s192 = sadd.s32 %s24, %s191
          %s193 = smul.addr %s192, 8
          %s194 = scalar_lea.hbm %s0, %s193
          %s195 = sshll.u32 %s194, 4
          %s196 = int_to_ptr.hbm [resolvable:$true] %s195
          %s197 = sshll.u32 %s188, 4
          %s198 = int_to_ptr.vmem [resolvable:$true] %s197
          %203 = dma.hbm_to_vmem [thread:$0]  %s196, 2048, %s198, %s185, 128, 128, 8
        $region24: #{cubic_attention_pallas.3} parent=19 // pred_fallthru
          _
        // Predicated region
        $region25: #{cubic_attention_pallas.3} parent=19 // pred_check
          %p204 = pneg %p78
        $region26: #{cubic_attention_pallas.3} parent=19 // pred_check_branch
          %206 = sbr.rel (%p204) target = $region28
        $region27: #{cubic_attention_pallas.3} parent=19 // pred_region
          %p207 = scmp.lt.s32.totalorder %s23, 1
          %s208 = scalar_select %p207, %s23, 1
          %p209 = scmp.lt.s32.totalorder %s24, 0
          %s210 = scalar_select %p209, %s24, 0
          %s211 = smul.addr %s208, 16
          %s212 = sadd.s32 %s210, %s211
          %s213 = smul.addr %s212, 8
          %s214 = scalar_lea.vmem %s1, %s213
        $region28: #{cubic_attention_pallas.3} parent=19 // pred_fallthru
          _
        // Predicated region
        $region29: #{cubic_attention_pallas.3} parent=19 // pred_check
          %p215 = pneg %p104
        $region30: #{cubic_attention_pallas.3} parent=19 // pred_check_branch
          %217 = sbr.rel (%p215) target = $region32
        $region31: #{cubic_attention_pallas.3} parent=19 // pred_region
          %p218 = scmp.lt.s32.totalorder %s23, 1
          %s219 = scalar_select %p218, %s23, 1
          %s220 = smul.addr %s219, 8
          %s221 = scalar_lea.vmem %s2, %s220
        $region32: #{cubic_attention_pallas.3} parent=19 // pred_fallthru
          _
      $region20: #{cubic_attention_pallas.3} parent=5 // pred_fallthru
        _
      %p222 = scmp.le.s32.totalorder 1, %s16
      %p223 = scmp.lt.s32.totalorder %s16, 3
      %p224 = pnand %p222, %p223
      %p225 = pneg %p224
      // Predicated region
      $region33: #{cubic_attention_pallas.3} parent=5 // pred_check
        _
      $region34: #{cubic_attention_pallas.3} parent=5 // pred_check_branch
        %227 = sbr.rel (%p224) target = $region36
      $region35: #{cubic_attention_pallas.3} parent=5 // pred_region
        %s228 = ssub.s32 %s16, 1
        %s229 = sand.u32 %s43, 1
        %s230 = scalar_lea.sflag [#allocation3], %s229
        %s231 = sand.u32 %s43, 1
        %s232 = smul.addr %s231, 128
        %s233 = scalar_lea.vmem [#allocation2], %s232
        // Predicated region
        $region37: #{cubic_attention_pallas.3} parent=35 // pred_check
          %p234 = pneg %p56
        $region38: #{cubic_attention_pallas.3} parent=35 // pred_check_branch
          %236 = sbr.rel (%p234) target = $region40
        $region39: #{cubic_attention_pallas.3} parent=35 // pred_region
          %238 = dma.done %s230, 2048
        $region40: #{cubic_attention_pallas.3} parent=35 // pred_fallthru
          _
        %s239 = sand.u32 %s43, 1
        %s240 = scalar_lea.sflag [#allocation3], %s239
        %s241 = sand.u32 %s43, 1
        %s242 = smul.addr %s241, 128
        %s243 = scalar_lea.vmem [#allocation2], %s242
        %p244 = pneg %p56
        %p245 = pneg %p53
        %p246 = scmp.lt.s32.totalorder %s25, 1
        %s247 = scalar_select %p246, %s25, 1
        %p248 = scmp.lt.s32.totalorder %s26, 0
        %s249 = scalar_select %p248, %s26, 0
        %s250 = smul.addr %s247, 16
        %s251 = sadd.s32 %s249, %s250
        %s252 = smul.addr %s251, 8
        %s253 = scalar_lea.vmem %s1, %s252
        %p254 = pneg %p84
        %p255 = pneg %p81
        %p256 = scmp.lt.s32.totalorder %s25, 1
        %s257 = scalar_select %p256, %s25, 1
        %s258 = smul.addr %s257, 8
        %s259 = scalar_lea.vmem %s2, %s258
        %p260 = pneg %p110
        %p261 = pneg %p107
        %p262 = pneg %p131
        %p263 = pneg %p128
        %p264 = pneg %p159
        %p265 = pneg %p156
        %s266 = sand.u32 %s146, 1
        %s267 = scalar_lea.sflag [#allocation4], %s266
        %s268 = sand.u32 %s146, 1
        %s269 = smul.addr %s268, 128
        %s270 = scalar_lea.vmem [#allocation5], %s269
        %p271 = scmp.lt.s32.totalorder %s25, 1
        %s272 = scalar_select %p271, %s25, 1
        %p273 = scmp.lt.s32.totalorder %s26, 0
        %s274 = scalar_select %p273, %s26, 0
        %s275 = smul.addr %s272, 16
        %s276 = sadd.s32 %s274, %s275
        %s277 = smul.addr %s276, 8
        %s278 = scalar_lea.vmem %s1, %s277
        %p279 = scmp.lt.s32.totalorder %s25, 1
        %s280 = scalar_select %p279, %s25, 1
        %s281 = smul.addr %s280, 8
        %s282 = scalar_lea.vmem %s2, %s281
        %v283 = vld [vmem:[%s233] sm:$0xff]
        %v284 = vld [vmem:[%s233 + $0x8] sm:$0xff]
        %v285 = vld [vmem:[%s233 + $0x10] sm:$0xff]
        %v286 = vld [vmem:[%s233 + $0x18] sm:$0xff]
        %v287 = vld [vmem:[%s233 + $0x20] sm:$0xff]
        %v288 = vld [vmem:[%s233 + $0x28] sm:$0xff]
        %v289 = vld [vmem:[%s233 + $0x30] sm:$0xff]
        %v290 = vld [vmem:[%s233 + $0x38] sm:$0xff]
        %v291 = vld [vmem:[%s233 + $0x40] sm:$0xff]
        %v292 = vld [vmem:[%s233 + $0x48] sm:$0xff]
        %v293 = vld [vmem:[%s233 + $0x50] sm:$0xff]
        %v294 = vld [vmem:[%s233 + $0x58] sm:$0xff]
        %v295 = vld [vmem:[%s233 + $0x60] sm:$0xff]
        %v296 = vld [vmem:[%s233 + $0x68] sm:$0xff]
        %v297 = vld [vmem:[%s233 + $0x70] sm:$0xff]
        %v298 = vld [vmem:[%s233 + $0x78] sm:$0xff]
        %v299 = vld [vmem:[%s282] sm:$0xff]
        %v300 = vld [vmem:[%s3] sm:$0xff]
        %vm301 = vcmask 195584
        %v302 = vsel %vm301, %v283, 0.0
        %v303 = vsel %vm301, %v284, 0.0
        %v304 = vadd.f32 %v302, %v303
        %v305 = vrot.slane %v304, 4
        %v306 = vadd.f32 %v304, %v305
        %v307 = vrot.slane %v306, 2
        %v308 = vadd.f32 %v306, %v307
        %v309 = vrot.slane %v308, 1
        %v310 = vadd.f32 %v308, %v309
        %v311 = vsel %vm301, %v285, 0.0
        %v312 = vsel %vm301, %v286, 0.0
        %v313 = vadd.f32 %v311, %v312
        %v314 = vrot.slane %v313, 4
        %v315 = vadd.f32 %v313, %v314
        %v316 = vrot.slane %v315, 2
        %v317 = vadd.f32 %v315, %v316
        %v318 = vrot.slane %v317, 1
        %v319 = vadd.f32 %v317, %v318
        %v320 = vsel %vm301, %v287, 0.0
        %v321 = vsel %vm301, %v288, 0.0
        %v322 = vadd.f32 %v320, %v321
        %v323 = vrot.slane %v322, 4
        %v324 = vadd.f32 %v322, %v323
        %v325 = vrot.slane %v324, 2
        %v326 = vadd.f32 %v324, %v325
        %v327 = vrot.slane %v326, 1
        %v328 = vadd.f32 %v326, %v327
        %v329 = vsel %vm301, %v289, 0.0
        %v330 = vsel %vm301, %v290, 0.0
        %v331 = vadd.f32 %v329, %v330
        %v332 = vrot.slane %v331, 4
        %v333 = vadd.f32 %v331, %v332
        %v334 = vrot.slane %v333, 2
        %v335 = vadd.f32 %v333, %v334
        %v336 = vrot.slane %v335, 1
        %v337 = vadd.f32 %v335, %v336
        %v338 = vsel %vm301, %v291, 0.0
        %v339 = vsel %vm301, %v292, 0.0
        %v340 = vadd.f32 %v338, %v339
        %v341 = vrot.slane %v340, 4
        %v342 = vadd.f32 %v340, %v341
        %v343 = vrot.slane %v342, 2
        %v344 = vadd.f32 %v342, %v343
        %v345 = vrot.slane %v344, 1
        %v346 = vadd.f32 %v344, %v345
        %v347 = vsel %vm301, %v293, 0.0
        %v348 = vsel %vm301, %v294, 0.0
        %v349 = vadd.f32 %v347, %v348
        %v350 = vrot.slane %v349, 4
        %v351 = vadd.f32 %v349, %v350
        %v352 = vrot.slane %v351, 2
        %v353 = vadd.f32 %v351, %v352
        %v354 = vrot.slane %v353, 1
        %v355 = vadd.f32 %v353, %v354
        %v356 = vsel %vm301, %v295, 0.0
        %v357 = vsel %vm301, %v296, 0.0
        %v358 = vadd.f32 %v356, %v357
        %v359 = vrot.slane %v358, 4
        %v360 = vadd.f32 %v358, %v359
        %v361 = vrot.slane %v360, 2
        %v362 = vadd.f32 %v360, %v361
        %v363 = vrot.slane %v362, 1
        %v364 = vadd.f32 %v362, %v363
        %v365 = vsel %vm301, %v297, 0.0
        %v366 = vsel %vm301, %v298, 0.0
        %v367 = vadd.f32 %v365, %v366
        %v368 = vrot.slane %v367, 4
        %v369 = vadd.f32 %v367, %v368
        %v370 = vrot.slane %v369, 2
        %v371 = vadd.f32 %v369, %v370
        %v372 = vrot.slane %v371, 1
        %v373 = vadd.f32 %v371, %v372
        %v375 = vrot.slane %v299, 1
        %v376 = vrot.slane %v299, 2
        %v377 = vrot.slane %v299, 3
        %v378 = vrot.slane %v299, 4
        %v379 = vrot.slane %v299, 5
        %v380 = vrot.slane %v299, 6
        %v381 = vrot.slane %v299, 7
        %v390 = vrot.slane %v283, 1
        %v391 = vrot.slane %v285, 1
        %v392 = vrot.slane %v287, 1
        %v393 = vrot.slane %v289, 1
        %v394 = vrot.slane %v291, 1
        %v395 = vrot.slane %v293, 1
        %v396 = vrot.slane %v295, 1
        %v397 = vrot.slane %v297, 1
        %vm414 = vcmask 1040384
        %v415 = vrot.slane %v283, 7
        %v416 = vrot.slane %v284, 7
        %v417 = vsel %vm414, %v415, %v416
        %v418 = vrot.slane %v285, 7
        %v419 = vrot.slane %v286, 7
        %v420 = vsel %vm414, %v418, %v419
        %v421 = vrot.slane %v287, 7
        %v422 = vrot.slane %v288, 7
        %v423 = vsel %vm414, %v421, %v422
        %v424 = vrot.slane %v289, 7
        %v425 = vrot.slane %v290, 7
        %v426 = vsel %vm414, %v424, %v425
        %v427 = vrot.slane %v291, 7
        %v428 = vrot.slane %v292, 7
        %v429 = vsel %vm414, %v427, %v428
        %v430 = vrot.slane %v293, 7
        %v431 = vrot.slane %v294, 7
        %v432 = vsel %vm414, %v430, %v431
        %v433 = vrot.slane %v295, 7
        %v434 = vrot.slane %v296, 7
        %v435 = vsel %vm414, %v433, %v434
        %v436 = vrot.slane %v297, 7
        %v437 = vrot.slane %v298, 7
        %v438 = vsel %vm414, %v436, %v437
        %v455 = vsel %vm414, %v390, %v415
        %v456 = vsel %vm414, %v391, %v418
        %v457 = vsel %vm414, %v392, %v421
        %v458 = vsel %vm414, %v393, %v424
        %v459 = vsel %vm414, %v394, %v427
        %v460 = vsel %vm414, %v395, %v430
        %v461 = vsel %vm414, %v396, %v433
        %v462 = vsel %vm414, %v397, %v436
        %v463 = vperm.slane %v299, 0
        %v464 = vperm.slane %v375, 0
        %v465 = vperm.slane %v376, 0
        %v466 = vperm.slane %v377, 0
        %v467 = vperm.slane %v378, 0
        %v468 = vperm.slane %v379, 0
        %v469 = vperm.slane %v380, 0
        %v470 = vperm.slane %v381, 0
        %471 = vset.pattern.permute.xlu0 0
        %472 = vperm.xlu0 %471, %v463
        %v473 = vpop.permute.xlu0 %472
        %475 = vset.pattern.permute.xlu0 0
        %476 = vperm.xlu0 %475, %v464
        %v477 = vpop.permute.xlu0 %476
        %479 = vset.pattern.permute.xlu0 0
        %480 = vperm.xlu0 %479, %v465
        %v481 = vpop.permute.xlu0 %480
        %483 = vset.pattern.permute.xlu0 0
        %484 = vperm.xlu0 %483, %v466
        %v485 = vpop.permute.xlu0 %484
        %487 = vset.pattern.permute.xlu0 0
        %488 = vperm.xlu0 %487, %v467
        %v489 = vpop.permute.xlu0 %488
        %491 = vset.pattern.permute.xlu0 0
        %492 = vperm.xlu0 %491, %v468
        %v493 = vpop.permute.xlu0 %492
        %495 = vset.pattern.permute.xlu0 0
        %496 = vperm.xlu0 %495, %v469
        %v497 = vpop.permute.xlu0 %496
        %499 = vset.pattern.permute.xlu0 0
        %500 = vperm.xlu0 %499, %v470
        %v501 = vpop.permute.xlu0 %500
        %v503 = vmul.f32 %v473, %v455
        %v504 = vmul.f32 %v473, %v417
        %v505 = vmul.f32 %v477, %v456
        %v506 = vmul.f32 %v477, %v420
        %v507 = vmul.f32 %v481, %v457
        %v508 = vmul.f32 %v481, %v423
        %v509 = vmul.f32 %v485, %v458
        %v510 = vmul.f32 %v485, %v426
        %v511 = vmul.f32 %v489, %v459
        %v512 = vmul.f32 %v489, %v429
        %v513 = vmul.f32 %v493, %v460
        %v514 = vmul.f32 %v493, %v432
        %v515 = vmul.f32 %v497, %v461
        %v516 = vmul.f32 %v497, %v435
        %v517 = vmul.f32 %v501, %v462
        %v518 = vmul.f32 %v501, %v438
        %519 = vset.pattern.permute.xlu0 1
        %520 = vperm.xlu0 %519, %v463
        %v521 = vpop.permute.xlu0 %520
        %523 = vset.pattern.permute.xlu0 1
        %524 = vperm.xlu0 %523, %v464
        %v525 = vpop.permute.xlu0 %524
        %527 = vset.pattern.permute.xlu0 1
        %528 = vperm.xlu0 %527, %v465
        %v529 = vpop.permute.xlu0 %528
        %531 = vset.pattern.permute.xlu0 1
        %532 = vperm.xlu0 %531, %v466
        %v533 = vpop.permute.xlu0 %532
        %535 = vset.pattern.permute.xlu0 1
        %536 = vperm.xlu0 %535, %v467
        %v537 = vpop.permute.xlu0 %536
        %539 = vset.pattern.permute.xlu0 1
        %540 = vperm.xlu0 %539, %v468
        %v541 = vpop.permute.xlu0 %540
        %543 = vset.pattern.permute.xlu0 1
        %544 = vperm.xlu0 %543, %v469
        %v545 = vpop.permute.xlu0 %544
        %547 = vset.pattern.permute.xlu0 1
        %548 = vperm.xlu0 %547, %v470
        %v549 = vpop.permute.xlu0 %548
        %v551 = vmul.f32 %v521, %v283
        %v552 = vmul.f32 %v521, %v284
        %v553 = vmul.f32 %v525, %v285
        %v554 = vmul.f32 %v525, %v286
        %v555 = vmul.f32 %v529, %v287
        %v556 = vmul.f32 %v529, %v288
        %v557 = vmul.f32 %v533, %v289
        %v558 = vmul.f32 %v533, %v290
        %v559 = vmul.f32 %v537, %v291
        %v560 = vmul.f32 %v537, %v292
        %v561 = vmul.f32 %v541, %v293
        %v562 = vmul.f32 %v541, %v294
        %v563 = vmul.f32 %v545, %v295
        %v564 = vmul.f32 %v545, %v296
        %v565 = vmul.f32 %v549, %v297
        %v566 = vmul.f32 %v549, %v298
        %v567 = vadd.f32 %v503, %v551
        %v568 = vadd.f32 %v504, %v552
        %v569 = vadd.f32 %v505, %v553
        %v570 = vadd.f32 %v506, %v554
        %v571 = vadd.f32 %v507, %v555
        %v572 = vadd.f32 %v508, %v556
        %v573 = vadd.f32 %v509, %v557
        %v574 = vadd.f32 %v510, %v558
        %v575 = vadd.f32 %v511, %v559
        %v576 = vadd.f32 %v512, %v560
        %v577 = vadd.f32 %v513, %v561
        %v578 = vadd.f32 %v514, %v562
        %v579 = vadd.f32 %v515, %v563
        %v580 = vadd.f32 %v516, %v564
        %v581 = vadd.f32 %v517, %v565
        %v582 = vadd.f32 %v518, %v566
        %vm583 = vcmask 1046528
        %v584 = vrot.slane %v284, 1
        %v585 = vsel %vm583, %v390, %v584
        %v586 = vrot.slane %v286, 1
        %v587 = vsel %vm583, %v391, %v586
        %v588 = vrot.slane %v288, 1
        %v589 = vsel %vm583, %v392, %v588
        %v590 = vrot.slane %v290, 1
        %v591 = vsel %vm583, %v393, %v590
        %v592 = vrot.slane %v292, 1
        %v593 = vsel %vm583, %v394, %v592
        %v594 = vrot.slane %v294, 1
        %v595 = vsel %vm583, %v395, %v594
        %v596 = vrot.slane %v296, 1
        %v597 = vsel %vm583, %v396, %v596
        %v598 = vrot.slane %v298, 1
        %v599 = vsel %vm583, %v397, %v598
        %v624 = vsel %vm583, %v584, %v416
        %v625 = vsel %vm583, %v586, %v419
        %v626 = vsel %vm583, %v588, %v422
        %v627 = vsel %vm583, %v590, %v425
        %v628 = vsel %vm583, %v592, %v428
        %v629 = vsel %vm583, %v594, %v431
        %v630 = vsel %vm583, %v596, %v434
        %v631 = vsel %vm583, %v598, %v437
        %632 = vset.pattern.permute.xlu0 2
        %633 = vperm.xlu0 %632, %v463
        %v634 = vpop.permute.xlu0 %633
        %636 = vset.pattern.permute.xlu0 2
        %637 = vperm.xlu0 %636, %v464
        %v638 = vpop.permute.xlu0 %637
        %640 = vset.pattern.permute.xlu0 2
        %641 = vperm.xlu0 %640, %v465
        %v642 = vpop.permute.xlu0 %641
        %644 = vset.pattern.permute.xlu0 2
        %645 = vperm.xlu0 %644, %v466
        %v646 = vpop.permute.xlu0 %645
        %648 = vset.pattern.permute.xlu0 2
        %649 = vperm.xlu0 %648, %v467
        %v650 = vpop.permute.xlu0 %649
        %652 = vset.pattern.permute.xlu0 2
        %653 = vperm.xlu0 %652, %v468
        %v654 = vpop.permute.xlu0 %653
        %656 = vset.pattern.permute.xlu0 2
        %657 = vperm.xlu0 %656, %v469
        %v658 = vpop.permute.xlu0 %657
        %660 = vset.pattern.permute.xlu0 2
        %661 = vperm.xlu0 %660, %v470
        %v662 = vpop.permute.xlu0 %661
        %v664 = vmul.f32 %v634, %v585
        %v665 = vmul.f32 %v634, %v624
        %v666 = vmul.f32 %v638, %v587
        %v667 = vmul.f32 %v638, %v625
        %v668 = vmul.f32 %v642, %v589
        %v669 = vmul.f32 %v642, %v626
        %v670 = vmul.f32 %v646, %v591
        %v671 = vmul.f32 %v646, %v627
        %v672 = vmul.f32 %v650, %v593
        %v673 = vmul.f32 %v650, %v628
        %v674 = vmul.f32 %v654, %v595
        %v675 = vmul.f32 %v654, %v629
        %v676 = vmul.f32 %v658, %v597
        %v677 = vmul.f32 %v658, %v630
        %v678 = vmul.f32 %v662, %v599
        %v679 = vmul.f32 %v662, %v631
        %v680 = vadd.f32 %v567, %v664
        %v681 = vadd.f32 %v568, %v665
        %v682 = vadd.f32 %v569, %v666
        %v683 = vadd.f32 %v570, %v667
        %v684 = vadd.f32 %v571, %v668
        %v685 = vadd.f32 %v572, %v669
        %v686 = vadd.f32 %v573, %v670
        %v687 = vadd.f32 %v574, %v671
        %v688 = vadd.f32 %v575, %v672
        %v689 = vadd.f32 %v576, %v673
        %v690 = vadd.f32 %v577, %v674
        %v691 = vadd.f32 %v578, %v675
        %v692 = vadd.f32 %v579, %v676
        %v693 = vadd.f32 %v580, %v677
        %v694 = vadd.f32 %v581, %v678
        %v695 = vadd.f32 %v582, %v679
        %v697 = vrot.slane %v300, 1
        %v698 = vrot.slane %v300, 2
        %v699 = vrot.slane %v300, 3
        %v700 = vrot.slane %v300, 4
        %v701 = vrot.slane %v300, 5
        %v702 = vrot.slane %v300, 6
        %v703 = vrot.slane %v300, 7
        %704 = vset.pattern.permute.xlu0 0
        %705 = vperm.xlu0 %704, %v300
        %v706 = vpop.permute.xlu0 %705
        %v708 = vperm.slane %v706, 0
        %709 = vset.pattern.permute.xlu0 0
        %710 = vperm.xlu0 %709, %v697
        %v711 = vpop.permute.xlu0 %710
        %v713 = vperm.slane %v711, 0
        %714 = vset.pattern.permute.xlu0 0
        %715 = vperm.xlu0 %714, %v698
        %v716 = vpop.permute.xlu0 %715
        %v718 = vperm.slane %v716, 0
        %719 = vset.pattern.permute.xlu0 0
        %720 = vperm.xlu0 %719, %v699
        %v721 = vpop.permute.xlu0 %720
        %v723 = vperm.slane %v721, 0
        %724 = vset.pattern.permute.xlu0 0
        %725 = vperm.xlu0 %724, %v700
        %v726 = vpop.permute.xlu0 %725
        %v728 = vperm.slane %v726, 0
        %729 = vset.pattern.permute.xlu0 0
        %730 = vperm.xlu0 %729, %v701
        %v731 = vpop.permute.xlu0 %730
        %v733 = vperm.slane %v731, 0
        %734 = vset.pattern.permute.xlu0 0
        %735 = vperm.xlu0 %734, %v702
        %v736 = vpop.permute.xlu0 %735
        %v738 = vperm.slane %v736, 0
        %739 = vset.pattern.permute.xlu0 0
        %740 = vperm.xlu0 %739, %v703
        %v741 = vpop.permute.xlu0 %740
        %v743 = vperm.slane %v741, 0
        %v744 = vmul.f32 %v708, %v310
        %v745 = vmul.f32 %v713, %v319
        %v746 = vmul.f32 %v718, %v328
        %v747 = vmul.f32 %v723, %v337
        %v748 = vmul.f32 %v728, %v346
        %v749 = vmul.f32 %v733, %v355
        %v750 = vmul.f32 %v738, %v364
        %v751 = vmul.f32 %v743, %v373
        %v752 = vsub.f32 %v680, %v744
        %v753 = vsub.f32 %v681, %v744
        %v754 = vsub.f32 %v682, %v745
        %v755 = vsub.f32 %v683, %v745
        %v756 = vsub.f32 %v684, %v746
        %v757 = vsub.f32 %v685, %v746
        %v758 = vsub.f32 %v686, %v747
        %v759 = vsub.f32 %v687, %v747
        %v760 = vsub.f32 %v688, %v748
        %v761 = vsub.f32 %v689, %v748
        %v762 = vsub.f32 %v690, %v749
        %v763 = vsub.f32 %v691, %v749
        %v764 = vsub.f32 %v692, %v750
        %v765 = vsub.f32 %v693, %v750
        %v766 = vsub.f32 %v694, %v751
        %v767 = vsub.f32 %v695, %v751
        %v768 = vperm.slane %v300, 0
        %v769 = vperm.slane %v697, 0
        %v770 = vperm.slane %v698, 0
        %v771 = vperm.slane %v699, 0
        %v772 = vperm.slane %v700, 0
        %v773 = vperm.slane %v701, 0
        %v774 = vperm.slane %v702, 0
        %v775 = vperm.slane %v703, 0
        %776 = vset.pattern.permute.xlu0 1
        %777 = vperm.xlu0 %776, %v768
        %v778 = vpop.permute.xlu0 %777
        %780 = vset.pattern.permute.xlu0 1
        %781 = vperm.xlu0 %780, %v769
        %v782 = vpop.permute.xlu0 %781
        %784 = vset.pattern.permute.xlu0 1
        %785 = vperm.xlu0 %784, %v770
        %v786 = vpop.permute.xlu0 %785
        %788 = vset.pattern.permute.xlu0 1
        %789 = vperm.xlu0 %788, %v771
        %v790 = vpop.permute.xlu0 %789
        %792 = vset.pattern.permute.xlu0 1
        %793 = vperm.xlu0 %792, %v772
        %v794 = vpop.permute.xlu0 %793
        %796 = vset.pattern.permute.xlu0 1
        %797 = vperm.xlu0 %796, %v773
        %v798 = vpop.permute.xlu0 %797
        %800 = vset.pattern.permute.xlu0 1
        %801 = vperm.xlu0 %800, %v774
        %v802 = vpop.permute.xlu0 %801
        %804 = vset.pattern.permute.xlu0 1
        %805 = vperm.xlu0 %804, %v775
        %v806 = vpop.permute.xlu0 %805
        %v808 = vmul.f32 %v778, %v283
        %v809 = vmul.f32 %v778, %v284
        %v810 = vmul.f32 %v782, %v285
        %v811 = vmul.f32 %v782, %v286
        %v812 = vmul.f32 %v786, %v287
        %v813 = vmul.f32 %v786, %v288
        %v814 = vmul.f32 %v790, %v289
        %v815 = vmul.f32 %v790, %v290
        %v816 = vmul.f32 %v794, %v291
        %v817 = vmul.f32 %v794, %v292
        %v818 = vmul.f32 %v798, %v293
        %v819 = vmul.f32 %v798, %v294
        %v820 = vmul.f32 %v802, %v295
        %v821 = vmul.f32 %v802, %v296
        %v822 = vmul.f32 %v806, %v297
        %v823 = vmul.f32 %v806, %v298
        %v824 = vadd.f32 %v752, %v808
        %v825 = vadd.f32 %v753, %v809
        %v826 = vadd.f32 %v754, %v810
        %v827 = vadd.f32 %v755, %v811
        %v828 = vadd.f32 %v756, %v812
        %v829 = vadd.f32 %v757, %v813
        %v830 = vadd.f32 %v758, %v814
        %v831 = vadd.f32 %v759, %v815
        %v832 = vadd.f32 %v760, %v816
        %v833 = vadd.f32 %v761, %v817
        %v834 = vadd.f32 %v762, %v818
        %v835 = vadd.f32 %v763, %v819
        %v836 = vadd.f32 %v764, %v820
        %v837 = vadd.f32 %v765, %v821
        %v838 = vadd.f32 %v766, %v822
        %v839 = vadd.f32 %v767, %v823
        %v840 = vld [vmem:[%s278] sm:$0xff]
        %v841 = vld [vmem:[%s278 + $0x8] sm:$0xff]
        %v842 = vld [vmem:[%s278 + $0x10] sm:$0xff]
        %v843 = vld [vmem:[%s278 + $0x18] sm:$0xff]
        %v844 = vld [vmem:[%s278 + $0x20] sm:$0xff]
        %v845 = vld [vmem:[%s278 + $0x28] sm:$0xff]
        %v846 = vld [vmem:[%s278 + $0x30] sm:$0xff]
        %v847 = vld [vmem:[%s278 + $0x38] sm:$0xff]
        %v848 = vld [vmem:[%s278 + $0x40] sm:$0xff]
        %v849 = vld [vmem:[%s278 + $0x48] sm:$0xff]
        %v850 = vld [vmem:[%s278 + $0x50] sm:$0xff]
        %v851 = vld [vmem:[%s278 + $0x58] sm:$0xff]
        %v852 = vld [vmem:[%s278 + $0x60] sm:$0xff]
        %v853 = vld [vmem:[%s278 + $0x68] sm:$0xff]
        %v854 = vld [vmem:[%s278 + $0x70] sm:$0xff]
        %v855 = vld [vmem:[%s278 + $0x78] sm:$0xff]
        %856 = vset.pattern.permute.xlu0 2
        %857 = vperm.xlu0 %856, %v768
        %v858 = vpop.permute.xlu0 %857
        %860 = vset.pattern.permute.xlu0 2
        %861 = vperm.xlu0 %860, %v769
        %v862 = vpop.permute.xlu0 %861
        %864 = vset.pattern.permute.xlu0 2
        %865 = vperm.xlu0 %864, %v770
        %v866 = vpop.permute.xlu0 %865
        %868 = vset.pattern.permute.xlu0 2
        %869 = vperm.xlu0 %868, %v771
        %v870 = vpop.permute.xlu0 %869
        %872 = vset.pattern.permute.xlu0 2
        %873 = vperm.xlu0 %872, %v772
        %v874 = vpop.permute.xlu0 %873
        %876 = vset.pattern.permute.xlu0 2
        %877 = vperm.xlu0 %876, %v773
        %v878 = vpop.permute.xlu0 %877
        %880 = vset.pattern.permute.xlu0 2
        %881 = vperm.xlu0 %880, %v774
        %v882 = vpop.permute.xlu0 %881
        %884 = vset.pattern.permute.xlu0 2
        %885 = vperm.xlu0 %884, %v775
        %v886 = vpop.permute.xlu0 %885
        %v888 = vmul.f32 %v858, %v840
        %v889 = vmul.f32 %v858, %v841
        %v890 = vmul.f32 %v862, %v842
        %v891 = vmul.f32 %v862, %v843
        %v892 = vmul.f32 %v866, %v844
        %v893 = vmul.f32 %v866, %v845
        %v894 = vmul.f32 %v870, %v846
        %v895 = vmul.f32 %v870, %v847
        %v896 = vmul.f32 %v874, %v848
        %v897 = vmul.f32 %v874, %v849
        %v898 = vmul.f32 %v878, %v850
        %v899 = vmul.f32 %v878, %v851
        %v900 = vmul.f32 %v882, %v852
        %v901 = vmul.f32 %v882, %v853
        %v902 = vmul.f32 %v886, %v854
        %v903 = vmul.f32 %v886, %v855
        %v904 = vadd.f32 %v824, %v888
        %v905 = vadd.f32 %v825, %v889
        %v906 = vadd.f32 %v826, %v890
        %v907 = vadd.f32 %v827, %v891
        %v908 = vadd.f32 %v828, %v892
        %v909 = vadd.f32 %v829, %v893
        %v910 = vadd.f32 %v830, %v894
        %v911 = vadd.f32 %v831, %v895
        %v912 = vadd.f32 %v832, %v896
        %v913 = vadd.f32 %v833, %v897
        %v914 = vadd.f32 %v834, %v898
        %v915 = vadd.f32 %v835, %v899
        %v916 = vadd.f32 %v836, %v900
        %v917 = vadd.f32 %v837, %v901
        %v918 = vadd.f32 %v838, %v902
        %v919 = vadd.f32 %v839, %v903
        %920 = vst.msk [vmem:[%s270] sm:$0xff] %vm301, %v904
        %921 = vst.msk [vmem:[%s270 + $0x8] sm:$0xff] %vm301, %v905
        %922 = vst.msk [vmem:[%s270 + $0x10] sm:$0xff] %vm301, %v906
        %923 = vst.msk [vmem:[%s270 + $0x18] sm:$0xff] %vm301, %v907
        %924 = vst.msk [vmem:[%s270 + $0x20] sm:$0xff] %vm301, %v908
        %925 = vst.msk [vmem:[%s270 + $0x28] sm:$0xff] %vm301, %v909
        %926 = vst.msk [vmem:[%s270 + $0x30] sm:$0xff] %vm301, %v910
        %927 = vst.msk [vmem:[%s270 + $0x38] sm:$0xff] %vm301, %v911
        %928 = vst.msk [vmem:[%s270 + $0x40] sm:$0xff] %vm301, %v912
        %929 = vst.msk [vmem:[%s270 + $0x48] sm:$0xff] %vm301, %v913
        %930 = vst.msk [vmem:[%s270 + $0x50] sm:$0xff] %vm301, %v914
        %931 = vst.msk [vmem:[%s270 + $0x58] sm:$0xff] %vm301, %v915
        %932 = vst.msk [vmem:[%s270 + $0x60] sm:$0xff] %vm301, %v916
        %933 = vst.msk [vmem:[%s270 + $0x68] sm:$0xff] %vm301, %v917
        %934 = vst.msk [vmem:[%s270 + $0x70] sm:$0xff] %vm301, %v918
        %935 = vst.msk [vmem:[%s270 + $0x78] sm:$0xff] %vm301, %v919
        %s936 = sand.u32 %s146, 1
        %s937 = scalar_lea.sflag [#allocation4], %s936
        %s938 = sand.u32 %s146, 1
        %s939 = smul.addr %s938, 128
        %s940 = scalar_lea.vmem [#allocation5], %s939
        // Predicated region
        $region41: #{cubic_attention_pallas.3} parent=35 // pred_check
          %p941 = pneg %p156
        $region42: #{cubic_attention_pallas.3} parent=35 // pred_check_branch
          %943 = sbr.rel (%p941) target = $region44
        $region43: #{cubic_attention_pallas.3} parent=35 // pred_region
          %945 = vsyncadd %s937, 0
          %s946 = smul.addr %s25, 16
          %s947 = sadd.s32 %s26, %s946
          %s948 = smul.addr %s947, 8
          %s949 = scalar_lea.hbm %s4, %s948
          %s950 = sshll.u32 %s940, 4
          %s951 = int_to_ptr.vmem [resolvable:$true] %s950
          %s952 = sshll.u32 %s949, 4
          %s953 = int_to_ptr.hbm [resolvable:$true] %s952
          %958 = dma.vmem_to_hbm [thread:$0]  %s951, 2048, %s953, %s937, 128, 128, 8
        $region44: #{cubic_attention_pallas.3} parent=35 // pred_fallthru
          _
      $region36: #{cubic_attention_pallas.3} parent=5 // pred_fallthru
        _
      %p959 = scmp.le.s32.totalorder 2, %s16
      // Predicated region
      $region45: #{cubic_attention_pallas.3} parent=5 // pred_check
        %p960 = pneg %p959
      $region46: #{cubic_attention_pallas.3} parent=5 // pred_check_branch
        %962 = sbr.rel (%p960) target = $region48
      $region47: #{cubic_attention_pallas.3} parent=5 // pred_region
        %s963 = ssub.s32 %s16, 2
        // Predicated region
        $region49: #{cubic_attention_pallas.3} parent=47 // pred_check
          %p964 = pneg %p162
        $region50: #{cubic_attention_pallas.3} parent=47 // pred_check_branch
          %966 = sbr.rel (%p964) target = $region52
        $region51: #{cubic_attention_pallas.3} parent=47 // pred_region
          %s967 = sand.u32 %s147, 1
          %s968 = scalar_lea.sflag [#allocation4], %s967
          %s969 = sand.u32 %s147, 1
          %s970 = smul.addr %s969, 128
          %s971 = scalar_lea.vmem [#allocation5], %s970
          %973 = dma.done %s968, 2048
        $region52: #{cubic_attention_pallas.3} parent=47 // pred_fallthru
          _
      $region48: #{cubic_attention_pallas.3} parent=5 // pred_fallthru
        _
    $region6: #{cubic_attention_pallas.3} parent=1 // loop_footer
      %s20 = sadd.s32 1, %s16
    $region7: #{cubic_attention_pallas.3} parent=1 // loop_footer_branch
      %15 = sbr.rel target = $region3
    $region8: #{cubic_attention_pallas.3} parent=1 // loop_exit
      _
    %974 = vsyncpa [#allocation3], 1
    %s975 = scalar_lea.sflag [#allocation3], 1
    %976 = vsyncpa %s975, 1
    %977 = vsyncpa [#allocation4], 1
    %s978 = scalar_lea.sflag [#allocation4], 1
    %979 = vsyncpa %s978, 1

</llo_original>
